<compile_context>
chip_gen: v7x
topology: tpu7x:2x2x1
jax: 0.10.0
libtpu: 0.0.40
codegen_flags: <defaults>
</compile_context>

<pallas_src>
import functools
import math

import jax
import jax.numpy as jnp
import numpy as np
from jax.experimental import pallas as pl
from jax.experimental.pallas import tpu as pltpu


def _rotate_half_matrix(num_heads, head_size):
    """(HID, HID) matrix R such that rotate_half(y) == y @ R for head-major y."""
    d = head_size
    half = d // 2
    blk = np.zeros((d, d), np.float32)
    for j in range(half):
        blk[j + half, j] = -1.0     # out[j]        = -y[j + half]
        blk[j, j + half] = 1.0      # out[j + half] =  y[j]
    return jnp.asarray(np.kron(np.eye(num_heads, dtype=np.float32), blk))


def _attn_kernel(x_ref, wbig_ref, bbig_ref, wo_ref, bo_ref, cos_ref, sin_ref,
                 mask_ref, out_ref, attnw_ref,
                 *, num_heads, head_size, batch_per_block, seq_len, seg, approx_recip):
    cdt = x_ref.dtype
    H, D, T = num_heads, head_size, seq_len

    x = x_ref[...]                                       # (rows, HID) compute dtype
    # One fused MXU matmul -> [q*s | rotate_half(q)*s | k | rotate_half(k) | v], f32.
    big = jnp.dot(x, wbig_ref[...], preferred_element_type=jnp.float32) + bbig_ref[...]

    cosf = cos_ref[...]                                  # (rows, seg) f32
    sinf = sin_ref[...]
    # RoPE with rotate_half folded into weight columns; 128-aligned segment slices.
    q = big[:, 0 * seg:1 * seg] * cosf + big[:, 1 * seg:2 * seg] * sinf
    k = big[:, 2 * seg:3 * seg] * cosf + big[:, 3 * seg:4 * seg] * sinf
    v = big[:, 4 * seg:5 * seg]
    # Hoisted casts: one full-width VPU pass each, outside the (b, h) loops.
    qc = q.astype(cdt)
    kc = k.astype(cdt)
    vc = v.astype(cdt)

    mask = mask_ref[...]                                 # (rows, T) f32, additive

    ctx_rows = []
    w_rows = []
    for b in range(batch_per_block):                     # static unroll over batches
        rsl = slice(b * T, (b + 1) * T)
        m_b = mask[rsl, :]
        ctx_heads = []
        w_heads = []
        for h in range(H):                               # static unroll over heads
            csl = slice(h * D, (h + 1) * D)
            # torch.matmul(query, key) with NO transpose (requires D == T); the
            # division by scaling is already folded into the q weight columns.
            scores = jnp.dot(qc[rsl, csl], kc[rsl, csl],
                             preferred_element_type=jnp.float32) + m_b
            # explicit f32 softmax; row normalisation routed to the EUP reciprocal.
            mx = jnp.max(scores, axis=-1, keepdims=True)
            p = jnp.exp(scores - mx)
            denom = jnp.sum(p, axis=-1, keepdims=True)
            w_h = (p * pl.reciprocal(denom, approx=approx_recip)).astype(cdt)
            w_heads.append(w_h)                          # matches `.to(query.dtype)`
            # TODO(synk): nn.functional.dropout is a no-op here (eval / p=0.0); omitted.
            ctx_heads.append(jnp.dot(w_h, vc[rsl, csl],
                                     preferred_element_type=jnp.float32))
        w_rows.append(jnp.concatenate(w_heads, axis=-1))      # (T, HID) cdt
        ctx_rows.append(jnp.concatenate(ctx_heads, axis=-1))  # (T, HID) f32

    attnw = w_rows[0] if batch_per_block == 1 else jnp.concatenate(w_rows, axis=0)
    ctx = ctx_rows[0] if batch_per_block == 1 else jnp.concatenate(ctx_rows, axis=0)

    # Single (rows, HID) @ (HID, HID) output projection straight from registers.
    out = jnp.dot(ctx.astype(cdt), wo_ref[...],
                  preferred_element_type=jnp.float32) + bo_ref[...]
    out_ref[...] = out.astype(out_ref.dtype)              # one full-block store
    attnw_ref[...] = attnw                                 # one full-block store


def _is_dual_tensorcore_chip():
    """True for chips with 2 TensorCores per chip (v7x); False for v5e/v6e/unknown."""
    try:
        kind = jax.devices()[0].device_kind.lower().replace(" ", "")
    except Exception:
        return False
    return ("v7" in kind) or ("tpu7" in kind)


def packed_conformer_self_attention(hidden_states, params, cos, sin, attention_mask,
                                    *, num_heads, head_size, compute_dtype=None,
                                    approx_reciprocal=True, per_batch_grid=None,
                                    single_buffer_weights=None):
    B, T, HID = hidden_states.shape
    H, D = num_heads, head_size
    if H * D != HID:
        raise ValueError("num_heads * head_size must equal hidden_size")
    if D != T:
        raise ValueError("reference semantics (un-transposed q@k) require head_size == seq_len")
    if compute_dtype is None:
        compute_dtype = hidden_states.dtype
    cdt = jnp.dtype(compute_dtype)
    f32 = jnp.float32

    per_batch = _is_dual_tensorcore_chip() if per_batch_grid is None else bool(per_batch_grid)
    single_buffer = per_batch if single_buffer_weights is None else bool(single_buffer_weights)

    wq, bq, wk, bk, wv, bv, wo, bo = params
    wq32, wk32, wv32, wo32 = (jnp.asarray(w, f32) for w in (wq, wk, wv, wo))
    bq_r, bk_r, bv_r, bo_r = (jnp.asarray(b, f32).reshape(1, HID) for b in (bq, bk, bv, bo))

    # Fold rotate_half AND the 1/scaling factor into the fused projection:
    #   rotate_half(x@W + b) == x@(W@R) + b@R ;  q-path scaled by s = sqrt(D).
    rot = _rotate_half_matrix(H, D)
    scale = float(D) ** 0.5                      # reference divides by scaling = D**-0.5

    seg = ((HID + 127) // 128) * 128             # 128-lane-aligned segment width

    def pad_cols(a):
        p = seg - a.shape[-1]
        return a if p == 0 else jnp.pad(a, ((0, 0), (0, p)))

    w_segments = [wq32 * scale, (wq32 @ rot) * scale, wk32, wk32 @ rot, wv32]
    b_segments = [bq_r * scale, (bq_r @ rot) * scale, bk_r, bk_r @ rot, bv_r]
    w_big = jnp.concatenate([pad_cols(s) for s in w_segments], axis=1)   # (HID, 5*seg)
    b_big = jnp.concatenate([pad_cols(s) for s in b_segments], axis=1)   # (1, 5*seg)

    # Compute-dtype at the boundary; biases / rotary tables / mask stay f32.
    x_flat = hidden_states.astype(cdt).reshape(B * T, HID)
    w_big_c = w_big.astype(cdt)
    wo_c = wo32.astype(cdt)

    # Rotary tables are position-only (batch-broadcast in the module): accept (T, D).
    cos = jnp.asarray(cos, f32)
    sin = jnp.asarray(sin, f32)
    if cos.ndim == 3:                            # tolerate (B, T, D) inputs
        cos, sin = cos[0], sin[0]
    cos_rows = jnp.tile(pad_cols(jnp.tile(cos, (1, H))), (B, 1))         # (B*T, seg)
    sin_rows = jnp.tile(pad_cols(jnp.tile(sin, (1, H))), (B, 1))

    # Mask: squeeze head dim and apply the causal_mask key-slice [:, :, :, :T] here.
    mask = jnp.asarray(attention_mask, f32)
    if mask.ndim == 4:
        mask = mask[:, 0]
    mask_rows = mask[:, :, :T].reshape(B * T, T)                         # (B*T, T)

    # Grid / blocking: collapse to one step on single-TC chips, per-batch on v7x.
    nb = 1 if per_batch else B
    rows = nb * T
    grid = (B // nb,)
    if per_batch:
        row_idx = lambda b: (b, 0)
        dims = ("parallel",)
    else:
        row_idx = lambda b: (0, 0)
        dims = ("arbitrary",)

    kernel = functools.partial(
        _attn_kernel, num_heads=H, head_size=D, batch_per_block=nb, seq_len=T,
        seg=seg, approx_recip=bool(approx_reciprocal))

    itm = cdt.itemsize

    # Cost estimate (advisory for the XLA scheduler).
    def nbytes(a):
        return int(np.prod(a.shape)) * jnp.dtype(a.dtype).itemsize
    flops = B * (2 * T * HID * 5 * seg + H * 4 * T * D * D + 2 * T * HID * HID)
    transcendentals = B * H * T * D
    bytes_accessed = (sum(nbytes(a) for a in (x_flat, w_big_c, b_big, wo_c, bo_r,
                                              cos_rows, sin_rows, mask_rows))
                      + 2 * B * T * HID * itm)
    cost = pl.CostEstimate(flops=int(flops), transcendentals=int(transcendentals),
                           bytes_accessed=int(bytes_accessed))

    def build_and_call(single_buffer_consts):
        const_kw = dict(pipeline_mode=pl.Buffered(1)) if single_buffer_consts else {}

        def const_spec(shape):
            return pl.BlockSpec(shape, lambda b: (0, 0), **const_kw)

        in_specs = [
            pl.BlockSpec((rows, HID), row_idx),    # hidden_states, rows flattened
            const_spec((HID, 5 * seg)),            # fused [q*s | qR*s | k | kR | v]
            const_spec((1, 5 * seg)),              # fused bias
            const_spec((HID, HID)),                # linear_out weight
            const_spec((1, HID)),                  # linear_out bias
            pl.BlockSpec((rows, seg), row_idx),    # cos (head-tiled, batch-tiled)
            pl.BlockSpec((rows, seg), row_idx),    # sin
            pl.BlockSpec((rows, T), row_idx),      # additive mask (head dim squeezed)
        ]
        out_specs = [
            pl.BlockSpec((rows, HID), row_idx),    # attn_output rows
            pl.BlockSpec((rows, HID), row_idx),    # attn_weights rows (head-major lanes)
        ]

        # VMEM budget from actual buffer counts (constants counted once when
        # single-buffered, twice otherwise; varying blocks are double-buffered).
        var_block = rows * (HID * itm + 2 * seg * 4 + T * 4 + 2 * HID * itm)
        const_block = HID * 5 * seg * itm + 5 * seg * 4 + HID * HID * itm + HID * 4
        const_mult = 1 if single_buffer_consts else 2
        vmem_limit = int(2 * var_block + const_mult * const_block + (4 << 20))

        return pl.pallas_call(
            kernel,
            out_shape=(jax.ShapeDtypeStruct((B * T, HID), cdt),
                       jax.ShapeDtypeStruct((B * T, HID), cdt)),
            grid_spec=pltpu.PrefetchScalarGridSpec(
                num_scalar_prefetch=0, grid=grid,
                in_specs=in_specs, out_specs=out_specs),
            compiler_params=pltpu.CompilerParams(
                dimension_semantics=dims, vmem_limit_bytes=vmem_limit),
            cost_estimate=cost,
        )(x_flat, w_big_c, b_big, wo_c, bo_r, cos_rows, sin_rows, mask_rows)

    attempts = (True, False) if single_buffer else (False,)
    last_err = None
    for sb in attempts:
        try:
            out_flat, attnw_flat = build_and_call(sb)
            break
        except Exception as err:   # fall back if Buffered(1) is unsupported here
            last_err = err
    else:
        raise last_err

    # Module-layout views: (B, T, HID) output, (B, H, T, D) attention weights.
    attn_output = out_flat.reshape(B, T, HID)
    attn_weights = attnw_flat.reshape(B, T, H, D).transpose(0, 2, 1, 3)
    return attn_output, attn_weights


# ----------------------------- pure-JAX reference ---------------------------------


def _rotate_half(x):
    half = x.shape[-1] // 2
    return jnp.concatenate([-x[..., half:], x[..., :half]], axis=-1)


def _reference_forward(x, params, cos, sin, mask, num_heads, head_size):
    """Pure-JAX f32 mirror of the PyTorch forward, for correctness checking."""
    f32 = jnp.float32
    x = jnp.asarray(x, f32)
    wq, bq, wk, bk, wv, bv, wo, bo = (jnp.asarray(p, f32) for p in params)
    B, T, HID = x.shape
    scaling = head_size ** (-0.5)

    def proj(w, b):
        return (x @ w + b).reshape(B, T, num_heads, head_size).transpose(0, 2, 1, 3)

    q, k, v = proj(wq, bq), proj(wk, bk), proj(wv, bv)
    c = jnp.asarray(cos, f32)[None, None]        # broadcast over batch & heads
    s = jnp.asarray(sin, f32)[None, None]
    q = q * c + _rotate_half(q) * s
    k = k * c + _rotate_half(k) * s
    scores = jnp.einsum('bhtd,bhde->bhte', q, k) / scaling     # torch.matmul(q, k)
    scores = scores + jnp.asarray(mask, f32)[:, :, :, :k.shape[-2]]
    w = jax.nn.softmax(scores, axis=-1)
    ctx = jnp.einsum('bhte,bhef->bhtf', w, v)                  # torch.matmul(w, v)
    ctx = ctx.transpose(0, 2, 1, 3).reshape(B, T, HID)
    return ctx @ wo + bo, w


def _init_linear(key, in_features, out_features):
    # nn.Linear default init: U(-1/sqrt(fan_in), 1/sqrt(fan_in)).
    kw, kb = jax.random.split(key)
    bound = 1.0 / math.sqrt(in_features)
    w_torch = jax.random.uniform(kw, (out_features, in_features), jnp.float32, -bound, bound)
    b = jax.random.uniform(kb, (out_features,), jnp.float32, -bound, bound)
    return w_torch.T, b                          # (in, out) weight, (out,) bias


if __name__ == "__main__":
    B, T, HID, H = 2, 16, 32, 2
    D = HID // H          # head_size = 16 == T (required by the un-transposed matmul)

    root = jax.random.PRNGKey(0)
    kx, kq, kk, kv, ko = jax.random.split(root, 5)

    x = jax.random.normal(kx, (B, T, HID), jnp.float32)
    params = (*_init_linear(kq, HID, HID), *_init_linear(kk, HID, HID),
              *_init_linear(kv, HID, HID), *_init_linear(ko, HID, HID))

    # rotary position embeddings, position-only: (T, D)
    inv_freq = 1.0 / (10000.0 ** (jnp.arange(0, D, 2, dtype=jnp.float32) / D))
    angles = jnp.arange(T, dtype=jnp.float32)[:, None] * inv_freq[None, :]
    emb = jnp.concatenate([angles, angles], axis=-1)
    cos, sin = jnp.cos(emb), jnp.sin(emb)

    # additive attention mask (B, 1, T, T): mask the last 4 key positions of batch 1
    mask = jnp.zeros((B, 1, T, T), jnp.float32)
    mask = mask.at[1, 0, :, T - 4:].set(-1e9)

    ref_out, ref_w = _reference_forward(x, params, cos, sin, mask, H, D)

    # 1) auto-selected grid path, f32 + exact reciprocal -> tight structural check.
    out, attnw = packed_conformer_self_attention(
        x, params, cos, sin, mask, num_heads=H, head_size=D,
        compute_dtype=jnp.float32, approx_reciprocal=False)
    out, attnw = jax.block_until_ready((out, attnw))
    np.testing.assert_allclose(np.asarray(out), np.asarray(ref_out), rtol=1e-4, atol=1e-4)
    np.testing.assert_allclose(np.asarray(attnw), np.asarray(ref_w), rtol=1e-4, atol=1e-4)

    # 2) forced v7x-style path: grid=(B,) parallel + single-buffered weight specs.
    out_pb, attnw_pb = packed_conformer_self_attention(
        x, params, cos, sin, mask, num_heads=H, head_size=D,
        compute_dtype=jnp.float32, approx_reciprocal=False,
        per_batch_grid=True, single_buffer_weights=True)
    out_pb, attnw_pb = jax.block_until_ready((out_pb, attnw_pb))
    np.testing.assert_allclose(np.asarray(out_pb), np.asarray(ref_out), rtol=1e-4, atol=1e-4)
    np.testing.assert_allclose(np.asarray(attnw_pb), np.asarray(ref_w), rtol=1e-4, atol=1e-4)

    # 3) production config: bf16 activations/weights at the boundary, f32
    #    scores/softmax/accum, EUP approximate reciprocal.  Loose sanity check only.
    out_bf, attnw_bf = packed_conformer_self_attention(
        x.astype(jnp.bfloat16), params, cos, sin, mask, num_heads=H, head_size=D)
    out_bf, attnw_bf = jax.block_until_ready((out_bf, attnw_bf))
    np.testing.assert_allclose(np.asarray(out_bf, dtype=np.float32), np.asarray(ref_out),
                               rtol=1e-1, atol=1e-1)

    print("KERNEL_OK")
</pallas_src>

<mosaic_0001>
module attributes {stable_mosaic.version = 11 : i64} {
  func.func @_attn_kernel(%arg0: i32, %arg1: memref<32x32xf32, #tpu.memory_space<vmem>>, %arg2: memref<32x640xf32, #tpu.memory_space<vmem>>, %arg3: memref<1x640xf32, #tpu.memory_space<vmem>>, %arg4: memref<32x32xf32, #tpu.memory_space<vmem>>, %arg5: memref<1x32xf32, #tpu.memory_space<vmem>>, %arg6: memref<32x128xf32, #tpu.memory_space<vmem>>, %arg7: memref<32x128xf32, #tpu.memory_space<vmem>>, %arg8: memref<32x16xf32, #tpu.memory_space<vmem>>, %arg9: memref<32x32xf32, #tpu.memory_space<vmem>>, %arg10: memref<32x32xf32, #tpu.memory_space<vmem>>) attributes {dimension_semantics = [#tpu.dimension_semantics<arbitrary>], iteration_bounds = array<i64: 1>, scalar_prefetch = 0 : i64, scratch_operands = 0 : i64, tpu.core_type = #tpu.core_type<tc>, window_params = [{pipeline_mode = #tpu.pipeline_mode<synchronous>, transform_indices = @transform_0, window_bounds = array<i64: 32, 32>}, {pipeline_mode = #tpu.pipeline_mode<synchronous>, transform_indices = @transform_1, window_bounds = array<i64: 32, 640>}, {pipeline_mode = #tpu.pipeline_mode<synchronous>, transform_indices = @transform_2, window_bounds = array<i64: 1, 640>}, {pipeline_mode = #tpu.pipeline_mode<synchronous>, transform_indices = @transform_3, window_bounds = array<i64: 32, 32>}, {pipeline_mode = #tpu.pipeline_mode<synchronous>, transform_indices = @transform_4, window_bounds = array<i64: 1, 32>}, {pipeline_mode = #tpu.pipeline_mode<synchronous>, transform_indices = @transform_5, window_bounds = array<i64: 32, 128>}, {pipeline_mode = #tpu.pipeline_mode<synchronous>, transform_indices = @transform_6, window_bounds = array<i64: 32, 128>}, {pipeline_mode = #tpu.pipeline_mode<synchronous>, transform_indices = @transform_7, window_bounds = array<i64: 32, 16>}, {pipeline_mode = #tpu.pipeline_mode<synchronous>, transform_indices = @transform_8, window_bounds = array<i64: 32, 32>}, {pipeline_mode = #tpu.pipeline_mode<synchronous>, transform_indices = @transform_9, window_bounds = array<i64: 32, 32>}]} {
    %c0 = arith.constant 0 : index
    %c0_0 = arith.constant 0 : index
    %0 = vector.load %arg1[%c0, %c0_0] : memref<32x32xf32, #tpu.memory_space<vmem>>, vector<32x32xf32>
    %c0_1 = arith.constant 0 : index
    %c0_2 = arith.constant 0 : index
    %1 = vector.load %arg2[%c0_1, %c0_2] : memref<32x640xf32, #tpu.memory_space<vmem>>, vector<32x640xf32>
    %cst = arith.constant dense<0.000000e+00> : vector<32x640xf32>
    %2 = tpu.matmul %0, %1, %cst {dimension_numbers = #tpu.dot_dimension_numbers<[1], [0], [0], [1], [0, 0, 1, 1], [], []>} : vector<32x32xf32>, vector<32x640xf32>, vector<32x640xf32> -> vector<32x640xf32>
    %c0_3 = arith.constant 0 : index
    %c0_4 = arith.constant 0 : index
    %3 = vector.load %arg3[%c0_3, %c0_4] : memref<1x640xf32, #tpu.memory_space<vmem>>, vector<1x640xf32>
    %4 = vector.broadcast %3 : vector<1x640xf32> to vector<32x640xf32>
    %5 = arith.addf %2, %4 : vector<32x640xf32>
    %c0_5 = arith.constant 0 : index
    %c0_6 = arith.constant 0 : index
    %6 = vector.load %arg6[%c0_5, %c0_6] : memref<32x128xf32, #tpu.memory_space<vmem>>, vector<32x128xf32>
    %c0_7 = arith.constant 0 : index
    %c0_8 = arith.constant 0 : index
    %7 = vector.load %arg7[%c0_7, %c0_8] : memref<32x128xf32, #tpu.memory_space<vmem>>, vector<32x128xf32>
    %8 = vector.extract_strided_slice %5 {offsets = [0, 0], sizes = [32, 128], strides = [1, 1]} : vector<32x640xf32> to vector<32x128xf32>
    %9 = arith.mulf %8, %6 : vector<32x128xf32>
    %10 = vector.extract_strided_slice %5 {offsets = [0, 128], sizes = [32, 128], strides = [1, 1]} : vector<32x640xf32> to vector<32x128xf32>
    %11 = arith.mulf %10, %7 : vector<32x128xf32>
    %12 = arith.addf %9, %11 : vector<32x128xf32>
    %13 = vector.extract_strided_slice %5 {offsets = [0, 256], sizes = [32, 128], strides = [1, 1]} : vector<32x640xf32> to vector<32x128xf32>
    %14 = arith.mulf %13, %6 : vector<32x128xf32>
    %15 = vector.extract_strided_slice %5 {offsets = [0, 384], sizes = [32, 128], strides = [1, 1]} : vector<32x640xf32> to vector<32x128xf32>
    %16 = arith.mulf %15, %7 : vector<32x128xf32>
    %17 = arith.addf %14, %16 : vector<32x128xf32>
    %18 = vector.extract_strided_slice %5 {offsets = [0, 512], sizes = [32, 128], strides = [1, 1]} : vector<32x640xf32> to vector<32x128xf32>
    %c0_9 = arith.constant 0 : index
    %c0_10 = arith.constant 0 : index
    %19 = vector.load %arg8[%c0_9, %c0_10] : memref<32x16xf32, #tpu.memory_space<vmem>>, vector<32x16xf32>
    %20 = vector.extract_strided_slice %19 {offsets = [0, 0], sizes = [16, 16], strides = [1, 1]} : vector<32x16xf32> to vector<16x16xf32>
    %21 = vector.extract_strided_slice %12 {offsets = [0, 0], sizes = [16, 16], strides = [1, 1]} : vector<32x128xf32> to vector<16x16xf32>
    %22 = vector.extract_strided_slice %17 {offsets = [0, 0], sizes = [16, 16], strides = [1, 1]} : vector<32x128xf32> to vector<16x16xf32>
    %cst_11 = arith.constant dense<0.000000e+00> : vector<16x16xf32>
    %23 = tpu.matmul %21, %22, %cst_11 {dimension_numbers = #tpu.dot_dimension_numbers<[1], [0], [0], [1], [0, 0, 1, 1], [], []>} : vector<16x16xf32>, vector<16x16xf32>, vector<16x16xf32> -> vector<16x16xf32>
    %24 = arith.addf %23, %20 : vector<16x16xf32>
    %cst_12 = arith.constant dense<0xFF800000> : vector<16xf32>
    %25 = vector.multi_reduction <maximumf>, %24, %cst_12 [1] : vector<16x16xf32> to vector<16xf32>
    %26 = vector.shape_cast %25 : vector<16xf32> to vector<16x1xf32>
    %27 = vector.broadcast %26 : vector<16x1xf32> to vector<16x16xf32>
    %28 = arith.subf %24, %27 : vector<16x16xf32>
    %29 = math.exp %28 : vector<16x16xf32>
    %cst_13 = arith.constant dense<0.000000e+00> : vector<16xf32>
    %30 = vector.multi_reduction <add>, %29, %cst_13 [1] : vector<16x16xf32> to vector<16xf32>
    %31 = vector.shape_cast %30 : vector<16xf32> to vector<16x1xf32>
    %32 = tpu.reciprocal %31 : vector<16x1xf32> -> vector<16x1xf32>
    %33 = vector.broadcast %32 : vector<16x1xf32> to vector<16x16xf32>
    %34 = arith.mulf %29, %33 : vector<16x16xf32>
    %35 = vector.extract_strided_slice %18 {offsets = [0, 0], sizes = [16, 16], strides = [1, 1]} : vector<32x128xf32> to vector<16x16xf32>
    %cst_14 = arith.constant dense<0.000000e+00> : vector<16x16xf32>
    %36 = tpu.matmul %34, %35, %cst_14 {dimension_numbers = #tpu.dot_dimension_numbers<[1], [0], [0], [1], [0, 0, 1, 1], [], []>} : vector<16x16xf32>, vector<16x16xf32>, vector<16x16xf32> -> vector<16x16xf32>
    %37 = vector.extract_strided_slice %12 {offsets = [0, 16], sizes = [16, 16], strides = [1, 1]} : vector<32x128xf32> to vector<16x16xf32>
    %38 = vector.extract_strided_slice %17 {offsets = [0, 16], sizes = [16, 16], strides = [1, 1]} : vector<32x128xf32> to vector<16x16xf32>
    %cst_15 = arith.constant dense<0.000000e+00> : vector<16x16xf32>
    %39 = tpu.matmul %37, %38, %cst_15 {dimension_numbers = #tpu.dot_dimension_numbers<[1], [0], [0], [1], [0, 0, 1, 1], [], []>} : vector<16x16xf32>, vector<16x16xf32>, vector<16x16xf32> -> vector<16x16xf32>
    %40 = arith.addf %39, %20 : vector<16x16xf32>
    %cst_16 = arith.constant dense<0xFF800000> : vector<16xf32>
    %41 = vector.multi_reduction <maximumf>, %40, %cst_16 [1] : vector<16x16xf32> to vector<16xf32>
    %42 = vector.shape_cast %41 : vector<16xf32> to vector<16x1xf32>
    %43 = vector.broadcast %42 : vector<16x1xf32> to vector<16x16xf32>
    %44 = arith.subf %40, %43 : vector<16x16xf32>
    %45 = math.exp %44 : vector<16x16xf32>
    %cst_17 = arith.constant dense<0.000000e+00> : vector<16xf32>
    %46 = vector.multi_reduction <add>, %45, %cst_17 [1] : vector<16x16xf32> to vector<16xf32>
    %47 = vector.shape_cast %46 : vector<16xf32> to vector<16x1xf32>
    %48 = tpu.reciprocal %47 : vector<16x1xf32> -> vector<16x1xf32>
    %49 = vector.broadcast %48 : vector<16x1xf32> to vector<16x16xf32>
    %50 = arith.mulf %45, %49 : vector<16x16xf32>
    %51 = vector.extract_strided_slice %18 {offsets = [0, 16], sizes = [16, 16], strides = [1, 1]} : vector<32x128xf32> to vector<16x16xf32>
    %cst_18 = arith.constant dense<0.000000e+00> : vector<16x16xf32>
    %52 = tpu.matmul %50, %51, %cst_18 {dimension_numbers = #tpu.dot_dimension_numbers<[1], [0], [0], [1], [0, 0, 1, 1], [], []>} : vector<16x16xf32>, vector<16x16xf32>, vector<16x16xf32> -> vector<16x16xf32>
    %53 = tpu.concatenate %34, %50 in 1 : vector<16x16xf32>, vector<16x16xf32> -> vector<16x32xf32>
    %54 = tpu.concatenate %36, %52 in 1 : vector<16x16xf32>, vector<16x16xf32> -> vector<16x32xf32>
    %55 = vector.extract_strided_slice %19 {offsets = [16, 0], sizes = [16, 16], strides = [1, 1]} : vector<32x16xf32> to vector<16x16xf32>
    %56 = vector.extract_strided_slice %12 {offsets = [16, 0], sizes = [16, 16], strides = [1, 1]} : vector<32x128xf32> to vector<16x16xf32>
    %57 = vector.extract_strided_slice %17 {offsets = [16, 0], sizes = [16, 16], strides = [1, 1]} : vector<32x128xf32> to vector<16x16xf32>
    %cst_19 = arith.constant dense<0.000000e+00> : vector<16x16xf32>
    %58 = tpu.matmul %56, %57, %cst_19 {dimension_numbers = #tpu.dot_dimension_numbers<[1], [0], [0], [1], [0, 0, 1, 1], [], []>} : vector<16x16xf32>, vector<16x16xf32>, vector<16x16xf32> -> vector<16x16xf32>
    %59 = arith.addf %58, %55 : vector<16x16xf32>
    %cst_20 = arith.constant dense<0xFF800000> : vector<16xf32>
    %60 = vector.multi_reduction <maximumf>, %59, %cst_20 [1] : vector<16x16xf32> to vector<16xf32>
    %61 = vector.shape_cast %60 : vector<16xf32> to vector<16x1xf32>
    %62 = vector.broadcast %61 : vector<16x1xf32> to vector<16x16xf32>
    %63 = arith.subf %59, %62 : vector<16x16xf32>
    %64 = math.exp %63 : vector<16x16xf32>
    %cst_21 = arith.constant dense<0.000000e+00> : vector<16xf32>
    %65 = vector.multi_reduction <add>, %64, %cst_21 [1] : vector<16x16xf32> to vector<16xf32>
    %66 = vector.shape_cast %65 : vector<16xf32> to vector<16x1xf32>
    %67 = tpu.reciprocal %66 : vector<16x1xf32> -> vector<16x1xf32>
    %68 = vector.broadcast %67 : vector<16x1xf32> to vector<16x16xf32>
    %69 = arith.mulf %64, %68 : vector<16x16xf32>
    %70 = vector.extract_strided_slice %18 {offsets = [16, 0], sizes = [16, 16], strides = [1, 1]} : vector<32x128xf32> to vector<16x16xf32>
    %cst_22 = arith.constant dense<0.000000e+00> : vector<16x16xf32>
    %71 = tpu.matmul %69, %70, %cst_22 {dimension_numbers = #tpu.dot_dimension_numbers<[1], [0], [0], [1], [0, 0, 1, 1], [], []>} : vector<16x16xf32>, vector<16x16xf32>, vector<16x16xf32> -> vector<16x16xf32>
    %72 = vector.extract_strided_slice %12 {offsets = [16, 16], sizes = [16, 16], strides = [1, 1]} : vector<32x128xf32> to vector<16x16xf32>
    %73 = vector.extract_strided_slice %17 {offsets = [16, 16], sizes = [16, 16], strides = [1, 1]} : vector<32x128xf32> to vector<16x16xf32>
    %cst_23 = arith.constant dense<0.000000e+00> : vector<16x16xf32>
    %74 = tpu.matmul %72, %73, %cst_23 {dimension_numbers = #tpu.dot_dimension_numbers<[1], [0], [0], [1], [0, 0, 1, 1], [], []>} : vector<16x16xf32>, vector<16x16xf32>, vector<16x16xf32> -> vector<16x16xf32>
    %75 = arith.addf %74, %55 : vector<16x16xf32>
    %cst_24 = arith.constant dense<0xFF800000> : vector<16xf32>
    %76 = vector.multi_reduction <maximumf>, %75, %cst_24 [1] : vector<16x16xf32> to vector<16xf32>
    %77 = vector.shape_cast %76 : vector<16xf32> to vector<16x1xf32>
    %78 = vector.broadcast %77 : vector<16x1xf32> to vector<16x16xf32>
    %79 = arith.subf %75, %78 : vector<16x16xf32>
    %80 = math.exp %79 : vector<16x16xf32>
    %cst_25 = arith.constant dense<0.000000e+00> : vector<16xf32>
    %81 = vector.multi_reduction <add>, %80, %cst_25 [1] : vector<16x16xf32> to vector<16xf32>
    %82 = vector.shape_cast %81 : vector<16xf32> to vector<16x1xf32>
    %83 = tpu.reciprocal %82 : vector<16x1xf32> -> vector<16x1xf32>
    %84 = vector.broadcast %83 : vector<16x1xf32> to vector<16x16xf32>
    %85 = arith.mulf %80, %84 : vector<16x16xf32>
    %86 = vector.extract_strided_slice %18 {offsets = [16, 16], sizes = [16, 16], strides = [1, 1]} : vector<32x128xf32> to vector<16x16xf32>
    %cst_26 = arith.constant dense<0.000000e+00> : vector<16x16xf32>
    %87 = tpu.matmul %85, %86, %cst_26 {dimension_numbers = #tpu.dot_dimension_numbers<[1], [0], [0], [1], [0, 0, 1, 1], [], []>} : vector<16x16xf32>, vector<16x16xf32>, vector<16x16xf32> -> vector<16x16xf32>
    %88 = tpu.concatenate %69, %85 in 1 : vector<16x16xf32>, vector<16x16xf32> -> vector<16x32xf32>
    %89 = tpu.concatenate %71, %87 in 1 : vector<16x16xf32>, vector<16x16xf32> -> vector<16x32xf32>
    %90 = tpu.concatenate %53, %88 in 0 : vector<16x32xf32>, vector<16x32xf32> -> vector<32x32xf32>
    %91 = tpu.concatenate %54, %89 in 0 : vector<16x32xf32>, vector<16x32xf32> -> vector<32x32xf32>
    %c0_27 = arith.constant 0 : index
    %c0_28 = arith.constant 0 : index
    %92 = vector.load %arg4[%c0_27, %c0_28] : memref<32x32xf32, #tpu.memory_space<vmem>>, vector<32x32xf32>
    %cst_29 = arith.constant dense<0.000000e+00> : vector<32x32xf32>
    %93 = tpu.matmul %91, %92, %cst_29 {dimension_numbers = #tpu.dot_dimension_numbers<[1], [0], [0], [1], [0, 0, 1, 1], [], []>} : vector<32x32xf32>, vector<32x32xf32>, vector<32x32xf32> -> vector<32x32xf32>
    %c0_30 = arith.constant 0 : index
    %c0_31 = arith.constant 0 : index
    %94 = vector.load %arg5[%c0_30, %c0_31] : memref<1x32xf32, #tpu.memory_space<vmem>>, vector<1x32xf32>
    %95 = vector.broadcast %94 : vector<1x32xf32> to vector<32x32xf32>
    %96 = arith.addf %93, %95 : vector<32x32xf32>
    %c0_32 = arith.constant 0 : index
    %c0_33 = arith.constant 0 : index
    %97 = vector.load %arg9[%c0_32, %c0_33] : memref<32x32xf32, #tpu.memory_space<vmem>>, vector<32x32xf32>
    tpu.vector_store %arg9[%c0_32, %c0_33], %96 {strides = array<i32>} : memref<32x32xf32, #tpu.memory_space<vmem>>, vector<32x32xf32>,
    %c0_34 = arith.constant 0 : index
    %c0_35 = arith.constant 0 : index
    %98 = vector.load %arg10[%c0_34, %c0_35] : memref<32x32xf32, #tpu.memory_space<vmem>>, vector<32x32xf32>
    tpu.vector_store %arg10[%c0_34, %c0_35], %90 {strides = array<i32>} : memref<32x32xf32, #tpu.memory_space<vmem>>, vector<32x32xf32>,
    return
  }
  func.func @transform_0(%arg0: i32) -> (i32, i32) {
    %c0_i32 = arith.constant 0 : i32
    %c0_i32_0 = arith.constant 0 : i32
    %c0_i32_1 = arith.constant 0 : i32
    return %c0_i32, %c0_i32_0 : i32, i32
  }
  func.func @transform_1(%arg0: i32) -> (i32, i32) {
    %c0_i32 = arith.constant 0 : i32
    %c0_i32_0 = arith.constant 0 : i32
    %c0_i32_1 = arith.constant 0 : i32
    return %c0_i32, %c0_i32_0 : i32, i32
  }
  func.func @transform_2(%arg0: i32) -> (i32, i32) {
    %c0_i32 = arith.constant 0 : i32
    %c0_i32_0 = arith.constant 0 : i32
    %c0_i32_1 = arith.constant 0 : i32
    return %c0_i32, %c0_i32_0 : i32, i32
  }
  func.func @transform_3(%arg0: i32) -> (i32, i32) {
    %c0_i32 = arith.constant 0 : i32
    %c0_i32_0 = arith.constant 0 : i32
    %c0_i32_1 = arith.constant 0 : i32
    return %c0_i32, %c0_i32_0 : i32, i32
  }
  func.func @transform_4(%arg0: i32) -> (i32, i32) {
    %c0_i32 = arith.constant 0 : i32
    %c0_i32_0 = arith.constant 0 : i32
    %c0_i32_1 = arith.constant 0 : i32
    return %c0_i32, %c0_i32_0 : i32, i32
  }
  func.func @transform_5(%arg0: i32) -> (i32, i32) {
    %c0_i32 = arith.constant 0 : i32
    %c0_i32_0 = arith.constant 0 : i32
    %c0_i32_1 = arith.constant 0 : i32
    return %c0_i32, %c0_i32_0 : i32, i32
  }
  func.func @transform_6(%arg0: i32) -> (i32, i32) {
    %c0_i32 = arith.constant 0 : i32
    %c0_i32_0 = arith.constant 0 : i32
    %c0_i32_1 = arith.constant 0 : i32
    return %c0_i32, %c0_i32_0 : i32, i32
  }
  func.func @transform_7(%arg0: i32) -> (i32, i32) {
    %c0_i32 = arith.constant 0 : i32
    %c0_i32_0 = arith.constant 0 : i32
    %c0_i32_1 = arith.constant 0 : i32
    return %c0_i32, %c0_i32_0 : i32, i32
  }
  func.func @transform_8(%arg0: i32) -> (i32, i32) {
    %c0_i32 = arith.constant 0 : i32
    %c0_i32_0 = arith.constant 0 : i32
    %c0_i32_1 = arith.constant 0 : i32
    return %c0_i32, %c0_i32_0 : i32, i32
  }
  func.func @transform_9(%arg0: i32) -> (i32, i32) {
    %c0_i32 = arith.constant 0 : i32
    %c0_i32_0 = arith.constant 0 : i32
    %c0_i32_1 = arith.constant 0 : i32
    return %c0_i32, %c0_i32_0 : i32, i32
  }
}

</mosaic_0001>

<llo_original>
// kernel: tpu_custom_call.1
$region0: #{tpu_custom_call.1}
  #allocation0 [shape = 'u32[]', space=smem, size = 0x4, offset = 0x4, fixed_abs, tag = 'smem constant byte address 0x4 - core index']
  #allocation1 [shape = 'u32[144,128]{1,0:T(1,128)}', space=vmem, size = 0x12000, scoped, tag = 'internal scratch']
  %s0 = inlined_call_operand.vmem [shape: f32[32,32], index: 0, kind: input, shape index: {}]
  %s1 = inlined_call_operand.hbm [shape: f32[32,640], index: 1, kind: input, shape index: {}]
  %s2 = inlined_call_operand.hbm [shape: f32[1,640], index: 2, kind: input, shape index: {}]
  %s3 = inlined_call_operand.hbm [shape: f32[32,32], index: 3, kind: input, shape index: {}]
  %s4 = inlined_call_operand.vmem [shape: f32[1,32], index: 4, kind: input, shape index: {}]
  %s5 = inlined_call_operand.vmem [shape: f32[32,128], index: 5, kind: input, shape index: {}]
  %s6 = inlined_call_operand.hbm [shape: f32[32,128], index: 6, kind: input, shape index: {}]
  %s7 = inlined_call_operand.vmem [shape: f32[32,16], index: 7, kind: input, shape index: {}]
  %s8 = inlined_call_operand.hbm [shape: f32[32,32], index: 8, kind: output, shape index: {0}]
  %s9 = inlined_call_operand.hbm [shape: f32[32,32], index: 9, kind: output, shape index: {1}]
  %10 = xla_tuple %s8, %s9
  %s11 = sld [smem:[#allocation0]]
  $region66: #{tpu_custom_call.1} parent=0
    _
  %s13 = ssub.s32 1, %s11
  %s14 = scalar_select 0, %s13, %s11
  $region1: #{tpu_custom_call.1} parent=0
    #allocation2 [shape = 'u8[81920]{0}', space=vmem, size = 0x14000, scoped, tag = 'input window, operand 1, single buffered']
    #allocation3 [shape = 's32[1]{0}', space=sflag, size = 0x4, scoped, tag = 'scoped memory for tpu_custom_call.1']
    #allocation4 [shape = 's32[1]{0}', space=sflag, size = 0x4, scoped, tag = 'scoped memory for tpu_custom_call.1']
    #allocation5 [shape = 'u8[2560]{0}', space=vmem, size = 0xc00, scoped, tag = 'input window, operand 2, single buffered']
    #allocation6 [shape = 's32[1]{0}', space=sflag, size = 0x4, scoped, tag = 'scoped memory for tpu_custom_call.1']
    #allocation7 [shape = 'u8[16384]{0}', space=vmem, size = 0x4000, scoped, tag = 'input window, operand 3, single buffered']
    #allocation8 [shape = 'u8[16384]{0}', space=vmem, size = 0x4000, scoped, tag = 'input window, operand 6, single buffered']
    #allocation9 [shape = 's32[1]{0}', space=sflag, size = 0x4, scoped, tag = 'scoped memory for tpu_custom_call.1']
    #allocation10 [shape = 'u8[16384]{0}', space=vmem, size = 0x4000, scoped, tag = 'output window, operand 0, single buffered']
    #allocation11 [shape = 'u8[16384]{0}', space=vmem, size = 0x4000, scoped, tag = 'output window, operand 1, single buffered']
    #allocation12 [shape = 's32[1]{0}', space=sflag, size = 0x4, scoped, tag = 'scoped memory for tpu_custom_call.1']
    %15 = vsyncpa [#allocation3], 0
    %16 = vsyncpa [#allocation6], 0
    %17 = vsyncpa [#allocation9], 0
    %18 = vsyncpa [#allocation4], 0
    %19 = vsyncpa [#allocation12], 0
    // Predicated region
    $region2: #{tpu_custom_call.1} parent=1 // pred_check
      _
    $region3: #{tpu_custom_call.1} parent=1 // pred_check_branch
      %21 = sbr.rel (0) target = $region5
    $region4: #{tpu_custom_call.1} parent=1 // pred_region
      _
    $region5: #{tpu_custom_call.1} parent=1 // pred_fallthru
      _
    // Predicated region
    $region6: #{tpu_custom_call.1} parent=1 // pred_check
      _
    $region7: #{tpu_custom_call.1} parent=1 // pred_check_branch
      %23 = sbr.rel (0) target = $region9
    $region8: #{tpu_custom_call.1} parent=1 // pred_region
      %s25 = ssub.s32 2560, 2560
      %26 = vsyncadd [#allocation3], %s25
      %s27 = sshll.u32 [#allocation2], 4
      %s28 = int_to_ptr.vmem [resolvable:$true] %s27
      %33 = dma.hbm_to_vmem [thread:$0]  %s1, 2560, %s28, [#allocation3], 640, 640, 40
    $region9: #{tpu_custom_call.1} parent=1 // pred_fallthru
      _
    // Predicated region
    $region10: #{tpu_custom_call.1} parent=1 // pred_check
      _
    $region11: #{tpu_custom_call.1} parent=1 // pred_check_branch
      %35 = sbr.rel (0) target = $region13
    $region12: #{tpu_custom_call.1} parent=1 // pred_region
      %s37 = ssub.s32 80, 80
      %38 = vsyncadd [#allocation6], %s37
      %s40 = sshll.u32 [#allocation5], 4
      %s41 = int_to_ptr.vmem [resolvable:$true] %s40
      %43 = dma.hbm_to_vmem [thread:$0]  %s2, 80, %s41, [#allocation6]
    $region13: #{tpu_custom_call.1} parent=1 // pred_fallthru
      _
    // Predicated region
    $region14: #{tpu_custom_call.1} parent=1 // pred_check
      _
    $region15: #{tpu_custom_call.1} parent=1 // pred_check_branch
      %45 = sbr.rel (0) target = $region17
    $region16: #{tpu_custom_call.1} parent=1 // pred_region
      %s47 = ssub.s32 512, 512
      %48 = vsyncadd [#allocation6], %s47
      %s49 = sshll.u32 [#allocation7], 4
      %s50 = int_to_ptr.vmem [resolvable:$true] %s49
      %55 = dma.hbm_to_vmem [thread:$0]  %s3, 512, %s50, [#allocation6], 128, 128, 8
    $region17: #{tpu_custom_call.1} parent=1 // pred_fallthru
      _
    // Predicated region
    $region18: #{tpu_custom_call.1} parent=1 // pred_check
      _
    $region19: #{tpu_custom_call.1} parent=1 // pred_check_branch
      %57 = sbr.rel (0) target = $region21
    $region20: #{tpu_custom_call.1} parent=1 // pred_region
      _
    $region21: #{tpu_custom_call.1} parent=1 // pred_fallthru
      _
    // Predicated region
    $region22: #{tpu_custom_call.1} parent=1 // pred_check
      _
    $region23: #{tpu_custom_call.1} parent=1 // pred_check_branch
      %59 = sbr.rel (0) target = $region25
    $region24: #{tpu_custom_call.1} parent=1 // pred_region
      _
    $region25: #{tpu_custom_call.1} parent=1 // pred_fallthru
      _
    // Predicated region
    $region26: #{tpu_custom_call.1} parent=1 // pred_check
      _
    $region27: #{tpu_custom_call.1} parent=1 // pred_check_branch
      %61 = sbr.rel (0) target = $region29
    $region28: #{tpu_custom_call.1} parent=1 // pred_region
      %s63 = ssub.s32 512, 512
      %64 = vsyncadd [#allocation9], %s63
      %s65 = sshll.u32 [#allocation8], 4
      %s66 = int_to_ptr.vmem [resolvable:$true] %s65
      %71 = dma.hbm_to_vmem [thread:$0]  %s6, 512, %s66, [#allocation9], 128, 128, 8
    $region29: #{tpu_custom_call.1} parent=1 // pred_fallthru
      _
    // Predicated region
    $region30: #{tpu_custom_call.1} parent=1 // pred_check
      _
    $region31: #{tpu_custom_call.1} parent=1 // pred_check_branch
      %73 = sbr.rel (0) target = $region33
    $region32: #{tpu_custom_call.1} parent=1 // pred_region
      _
    $region33: #{tpu_custom_call.1} parent=1 // pred_fallthru
      _
    // Predicated region
    $region34: #{tpu_custom_call.1} parent=1 // pred_check
      _
    $region35: #{tpu_custom_call.1} parent=1 // pred_check_branch
      %75 = sbr.rel (0) target = $region37
    $region36: #{tpu_custom_call.1} parent=1 // pred_region
      %76 = dma.done [#allocation3], 2560
    $region37: #{tpu_custom_call.1} parent=1 // pred_fallthru
      _
    // Predicated region
    $region38: #{tpu_custom_call.1} parent=1 // pred_check
      _
    $region39: #{tpu_custom_call.1} parent=1 // pred_check_branch
      %78 = sbr.rel (0) target = $region41
    $region40: #{tpu_custom_call.1} parent=1 // pred_region
      %79 = dma.done [#allocation6], 80
    $region41: #{tpu_custom_call.1} parent=1 // pred_fallthru
      _
    // Predicated region
    $region42: #{tpu_custom_call.1} parent=1 // pred_check
      _
    $region43: #{tpu_custom_call.1} parent=1 // pred_check_branch
      %81 = sbr.rel (0) target = $region45
    $region44: #{tpu_custom_call.1} parent=1 // pred_region
      %82 = dma.done [#allocation6], 512
    $region45: #{tpu_custom_call.1} parent=1 // pred_fallthru
      _
    // Predicated region
    $region46: #{tpu_custom_call.1} parent=1 // pred_check
      _
    $region47: #{tpu_custom_call.1} parent=1 // pred_check_branch
      %84 = sbr.rel (0) target = $region49
    $region48: #{tpu_custom_call.1} parent=1 // pred_region
      %85 = dma.done [#allocation9], 512
    $region49: #{tpu_custom_call.1} parent=1 // pred_fallthru
      _
    %v86 = vld [vmem:[%s0] sm:$0xff]
    %v87 = vld [vmem:[%s0 + $0x8] sm:$0xff]
    %v88 = vld [vmem:[%s0 + $0x10] sm:$0xff]
    %v89 = vld [vmem:[%s0 + $0x18] sm:$0xff]
    %v90 = vld [vmem:[#allocation2] sm:$0xff]
    %v91 = vld [vmem:[#allocation2 + $0x8] sm:$0xff]
    %v92 = vld [vmem:[#allocation2 + $0x10] sm:$0xff]
    %v93 = vld [vmem:[#allocation2 + $0x18] sm:$0xff]
    %v94 = vld [vmem:[#allocation2 + $0x20] sm:$0xff]
    %v95 = vld [vmem:[#allocation2 + $0x28] sm:$0xff]
    %v96 = vld [vmem:[#allocation2 + $0x30] sm:$0xff]
    %v97 = vld [vmem:[#allocation2 + $0x38] sm:$0xff]
    %v98 = vld [vmem:[#allocation2 + $0x40] sm:$0xff]
    %v99 = vld [vmem:[#allocation2 + $0x48] sm:$0xff]
    %v100 = vld [vmem:[#allocation2 + $0x50] sm:$0xff]
    %v101 = vld [vmem:[#allocation2 + $0x58] sm:$0xff]
    %v102 = vld [vmem:[#allocation2 + $0x60] sm:$0xff]
    %v103 = vld [vmem:[#allocation2 + $0x68] sm:$0xff]
    %v104 = vld [vmem:[#allocation2 + $0x70] sm:$0xff]
    %v105 = vld [vmem:[#allocation2 + $0x78] sm:$0xff]
    %v106 = vld [vmem:[#allocation2 + $0x80] sm:$0xff]
    %v107 = vld [vmem:[#allocation2 + $0x88] sm:$0xff]
    %v108 = vld [vmem:[#allocation2 + $0x90] sm:$0xff]
    %v109 = vld [vmem:[#allocation2 + $0x98] sm:$0xff]
    %v110 = vld [vmem:[#allocation5] sm:$0x1f]
    %v112 = vlaneseq
    %v113 = vshrl.u32 %v112, 7
    %v114 = vsub.s32 0, %v113
    %v115 = vrot.slane %v110, %v114
    %v116 = vlaneseq
    %v117 = vshrl.u32 %v116, 7
    %v118 = vsub.s32 1, %v117
    %v119 = vrot.slane %v110, %v118
    %v120 = vlaneseq
    %v121 = vshrl.u32 %v120, 7
    %v122 = vsub.s32 2, %v121
    %v123 = vrot.slane %v110, %v122
    %v124 = vlaneseq
    %v125 = vshrl.u32 %v124, 7
    %v126 = vsub.s32 3, %v125
    %v127 = vrot.slane %v110, %v126
    %v128 = vlaneseq
    %v129 = vshrl.u32 %v128, 7
    %v130 = vsub.s32 4, %v129
    %v131 = vrot.slane %v110, %v130
    %vm137 = vcmask 261120
    %v139 = vsel %vm137, %v86, 0
    %v142 = vsel %vm137, %v87, 0
    %v145 = vsel %vm137, %v88, 0
    %v148 = vsel %vm137, %v89, 0
    %150 = vmatprep.subr.mxu0 %v91
    %151 = vmatpush1.msra.mxu0 %v90
    %152 = vmatprep.subr.mxu0 %v96
    %153 = vmatpush1.msra.mxu0 %v95
    %154 = vmatprep.subr.mxu0 %v101
    %155 = vmatpush1.msra.mxu0 %v100
    %156 = vmatprep.subr.mxu0 %v106
    %157 = vmatpush1.msra.mxu0 %v105
    %158 = vmatprep.subr.mxu0 0.0
    %159 = vmatpush1.msra.mxu0 0.0
    %160 = vmatprep.subr.mxu0 0.0
    %161 = vmatpush1.msra.mxu0 0.0
    %162 = vmatprep.subr.mxu0 0.0
    %163 = vmatpush1.msra.mxu0 0.0
    %164 = vmatprep.subr.mxu0 0.0
    %165 = vmatpush1.msra.mxu0 0.0
    %166 = vmatprep.subr.mxu0 0.0
    %167 = vmatpush1.msra.mxu0 0.0
    %168 = vmatprep.subr.mxu0 0.0
    %169 = vmatpush1.msra.mxu0 0.0
    %170 = vmatprep.subr.mxu0 0.0
    %171 = vmatpush1.msra.mxu0 0.0
    %172 = vmatprep.subr.mxu0 0.0
    %173 = vmatpush1.msra.mxu0 0.0
    %174 = vmatprep.subr.mxu0 0.0
    %175 = vmatpush1.msra.mxu0 0.0
    %176 = vmatprep.subr.mxu0 0.0
    %177 = vmatpush1.msra.mxu0 0.0
    %178 = vmatprep.subr.mxu0 0.0
    %179 = vmatpush1.msra.mxu0 0.0
    %180 = vmatprep.subr.mxu0 0.0
    %181 = vmatpush1.msra.mxu0 0.0
    %182 = vmatprep.subr.mxu0 0.0
    %183 = vmatpush1.msra.mxu0 0.0
    %184 = vmatprep.subr.mxu0 0.0
    %185 = vmatpush1.msra.mxu0 0.0
    %186 = vmatprep.subr.mxu0 0.0
    %187 = vmatpush1.msra.mxu0 0.0
    %188 = vmatprep.subr.mxu0 0.0
    %189 = vmatpush1.msra.mxu0 0.0
    %190 = vmatprep.subr.mxu0 0.0
    %191 = vmatpush1.msra.mxu0 0.0
    %192 = vmatprep.subr.mxu0 0.0
    %193 = vmatpush1.msra.mxu0 0.0
    %194 = vmatprep.subr.mxu0 0.0
    %195 = vmatpush1.msra.mxu0 0.0
    %196 = vmatprep.subr.mxu0 0.0
    %197 = vmatpush1.msra.mxu0 0.0
    %198 = vmatprep.subr.mxu0 0.0
    %199 = vmatpush1.msra.mxu0 0.0
    %200 = vmatprep.subr.mxu0 0.0
    %201 = vmatpush1.msra.mxu0 0.0
    %202 = vmatprep.subr.mxu0 0.0
    %203 = vmatpush1.msra.mxu0 0.0
    %204 = vmatprep.subr.mxu0 0.0
    %205 = vmatpush1.msra.mxu0 0.0
    %206 = vmatprep.subr.mxu0 0.0
    %207 = vmatpush1.msra.mxu0 0.0
    %208 = vmatprep.subr.mxu0 0.0
    %209 = vmatpush1.msra.mxu0 0.0
    %210 = vmatprep.subr.mxu0 0.0
    %211 = vmatpush1.msra.mxu0 0.0
    %212 = vmatprep.subr.mxu0 0.0
    %213 = vmatpush1.msra.mxu0 0.0
    %214 = vmatprep.mubr.f32.mxu0 0.0
    %215 = vmatmul.mubr.f32.gmra.mrb[0].mxu0 %v139
    %v216 = vpop.f32.mrb[0].mxu0
    %v217 = vadd.f32 %v115, %v216
    %v218 = vpop.f32.mrb[0].mxu0
    %v219 = vadd.f32 %v119, %v218
    %220 = vmatprep.mubr.f32.mxu0 0.0
    %221 = vmatmul.mubr.f32.gmra.mrb[0].mxu0 %v142
    %v222 = vpop.f32.mrb[0].mxu0
    %v223 = vadd.f32 %v115, %v222
    %v224 = vpop.f32.mrb[0].mxu0
    %v225 = vadd.f32 %v119, %v224
    %226 = vmatprep.mubr.f32.mxu0 0.0
    %227 = vmatmul.mubr.f32.gmra.mrb[0].mxu0 %v145
    %v228 = vpop.f32.mrb[0].mxu0
    %v229 = vadd.f32 %v115, %v228
    %v230 = vpop.f32.mrb[0].mxu0
    %v231 = vadd.f32 %v119, %v230
    %232 = vmatprep.mubr.f32.mxu0 0.0
    %233 = vmatmul.mubr.f32.gmra.mrb[0].mxu0 %v148
    %v234 = vpop.f32.mrb[0].mxu0
    %v235 = vadd.f32 %v115, %v234
    %v236 = vpop.f32.mrb[0].mxu0
    %v237 = vadd.f32 %v119, %v236
    %238 = vdwg.mxu0
    %239 = vmatprep.subr.mxu0 %v93
    %240 = vmatpush1.msra.mxu0 %v92
    %241 = vmatprep.subr.mxu0 %v98
    %242 = vmatpush1.msra.mxu0 %v97
    %243 = vmatprep.subr.mxu0 %v103
    %244 = vmatpush1.msra.mxu0 %v102
    %245 = vmatprep.subr.mxu0 %v108
    %246 = vmatpush1.msra.mxu0 %v107
    %247 = vmatprep.subr.mxu0 0.0
    %248 = vmatpush1.msra.mxu0 0.0
    %249 = vmatprep.subr.mxu0 0.0
    %250 = vmatpush1.msra.mxu0 0.0
    %251 = vmatprep.subr.mxu0 0.0
    %252 = vmatpush1.msra.mxu0 0.0
    %253 = vmatprep.subr.mxu0 0.0
    %254 = vmatpush1.msra.mxu0 0.0
    %255 = vmatprep.subr.mxu0 0.0
    %256 = vmatpush1.msra.mxu0 0.0
    %257 = vmatprep.subr.mxu0 0.0
    %258 = vmatpush1.msra.mxu0 0.0
    %259 = vmatprep.subr.mxu0 0.0
    %260 = vmatpush1.msra.mxu0 0.0
    %261 = vmatprep.subr.mxu0 0.0
    %262 = vmatpush1.msra.mxu0 0.0
    %263 = vmatprep.subr.mxu0 0.0
    %264 = vmatpush1.msra.mxu0 0.0
    %265 = vmatprep.subr.mxu0 0.0
    %266 = vmatpush1.msra.mxu0 0.0
    %267 = vmatprep.subr.mxu0 0.0
    %268 = vmatpush1.msra.mxu0 0.0
    %269 = vmatprep.subr.mxu0 0.0
    %270 = vmatpush1.msra.mxu0 0.0
    %271 = vmatprep.subr.mxu0 0.0
    %272 = vmatpush1.msra.mxu0 0.0
    %273 = vmatprep.subr.mxu0 0.0
    %274 = vmatpush1.msra.mxu0 0.0
    %275 = vmatprep.subr.mxu0 0.0
    %276 = vmatpush1.msra.mxu0 0.0
    %277 = vmatprep.subr.mxu0 0.0
    %278 = vmatpush1.msra.mxu0 0.0
    %279 = vmatprep.subr.mxu0 0.0
    %280 = vmatpush1.msra.mxu0 0.0
    %281 = vmatprep.subr.mxu0 0.0
    %282 = vmatpush1.msra.mxu0 0.0
    %283 = vmatprep.subr.mxu0 0.0
    %284 = vmatpush1.msra.mxu0 0.0
    %285 = vmatprep.subr.mxu0 0.0
    %286 = vmatpush1.msra.mxu0 0.0
    %287 = vmatprep.subr.mxu0 0.0
    %288 = vmatpush1.msra.mxu0 0.0
    %289 = vmatprep.subr.mxu0 0.0
    %290 = vmatpush1.msra.mxu0 0.0
    %291 = vmatprep.subr.mxu0 0.0
    %292 = vmatpush1.msra.mxu0 0.0
    %293 = vmatprep.subr.mxu0 0.0
    %294 = vmatpush1.msra.mxu0 0.0
    %295 = vmatprep.subr.mxu0 0.0
    %296 = vmatpush1.msra.mxu0 0.0
    %297 = vmatprep.subr.mxu0 0.0
    %298 = vmatpush1.msra.mxu0 0.0
    %299 = vmatprep.subr.mxu0 0.0
    %300 = vmatpush1.msra.mxu0 0.0
    %301 = vmatprep.subr.mxu0 0.0
    %302 = vmatpush1.msra.mxu0 0.0
    %303 = vmatprep.mubr.f32.mxu0 0.0
    %304 = vmatmul.mubr.f32.gmra.mrb[0].mxu0 %v139
    %v305 = vpop.f32.mrb[0].mxu0
    %v306 = vadd.f32 %v123, %v305
    %v307 = vpop.f32.mrb[0].mxu0
    %v308 = vadd.f32 %v127, %v307
    %309 = vmatprep.mubr.f32.mxu0 0.0
    %310 = vmatmul.mubr.f32.gmra.mrb[0].mxu0 %v142
    %v311 = vpop.f32.mrb[0].mxu0
    %v312 = vadd.f32 %v123, %v311
    %v313 = vpop.f32.mrb[0].mxu0
    %v314 = vadd.f32 %v127, %v313
    %315 = vmatprep.mubr.f32.mxu0 0.0
    %316 = vmatmul.mubr.f32.gmra.mrb[0].mxu0 %v145
    %v317 = vpop.f32.mrb[0].mxu0
    %v318 = vadd.f32 %v123, %v317
    %v319 = vpop.f32.mrb[0].mxu0
    %v320 = vadd.f32 %v127, %v319
    %321 = vmatprep.mubr.f32.mxu0 0.0
    %322 = vmatmul.mubr.f32.gmra.mrb[0].mxu0 %v148
    %v323 = vpop.f32.mrb[0].mxu0
    %v324 = vadd.f32 %v123, %v323
    %v325 = vpop.f32.mrb[0].mxu0
    %v326 = vadd.f32 %v127, %v325
    %327 = vdwg.mxu0
    %328 = vmatprep.subr.mxu0 0.0
    %329 = vmatpush1.msra.mxu0 %v94
    %330 = vmatprep.subr.mxu0 0.0
    %331 = vmatpush1.msra.mxu0 %v99
    %332 = vmatprep.subr.mxu0 0.0
    %333 = vmatpush1.msra.mxu0 %v104
    %334 = vmatprep.subr.mxu0 0.0
    %335 = vmatpush1.msra.mxu0 %v109
    %336 = vmatprep.subr.mxu0 0.0
    %337 = vmatpush1.msra.mxu0 0.0
    %338 = vmatprep.subr.mxu0 0.0
    %339 = vmatpush1.msra.mxu0 0.0
    %340 = vmatprep.subr.mxu0 0.0
    %341 = vmatpush1.msra.mxu0 0.0
    %342 = vmatprep.subr.mxu0 0.0
    %343 = vmatpush1.msra.mxu0 0.0
    %344 = vmatprep.subr.mxu0 0.0
    %345 = vmatpush1.msra.mxu0 0.0
    %346 = vmatprep.subr.mxu0 0.0
    %347 = vmatpush1.msra.mxu0 0.0
    %348 = vmatprep.subr.mxu0 0.0
    %349 = vmatpush1.msra.mxu0 0.0
    %350 = vmatprep.subr.mxu0 0.0
    %351 = vmatpush1.msra.mxu0 0.0
    %352 = vmatprep.subr.mxu0 0.0
    %353 = vmatpush1.msra.mxu0 0.0
    %354 = vmatprep.subr.mxu0 0.0
    %355 = vmatpush1.msra.mxu0 0.0
    %356 = vmatprep.subr.mxu0 0.0
    %357 = vmatpush1.msra.mxu0 0.0
    %358 = vmatprep.subr.mxu0 0.0
    %359 = vmatpush1.msra.mxu0 0.0
    %360 = vmatprep.subr.mxu0 0.0
    %361 = vmatpush1.msra.mxu0 0.0
    %362 = vmatprep.subr.mxu0 0.0
    %363 = vmatpush1.msra.mxu0 0.0
    %364 = vmatprep.subr.mxu0 0.0
    %365 = vmatpush1.msra.mxu0 0.0
    %366 = vmatprep.subr.mxu0 0.0
    %367 = vmatpush1.msra.mxu0 0.0
    %368 = vmatprep.subr.mxu0 0.0
    %369 = vmatpush1.msra.mxu0 0.0
    %370 = vmatprep.subr.mxu0 0.0
    %371 = vmatpush1.msra.mxu0 0.0
    %372 = vmatprep.subr.mxu0 0.0
    %373 = vmatpush1.msra.mxu0 0.0
    %374 = vmatprep.subr.mxu0 0.0
    %375 = vmatpush1.msra.mxu0 0.0
    %376 = vmatprep.subr.mxu0 0.0
    %377 = vmatpush1.msra.mxu0 0.0
    %378 = vmatprep.subr.mxu0 0.0
    %379 = vmatpush1.msra.mxu0 0.0
    %380 = vmatprep.subr.mxu0 0.0
    %381 = vmatpush1.msra.mxu0 0.0
    %382 = vmatprep.subr.mxu0 0.0
    %383 = vmatpush1.msra.mxu0 0.0
    %384 = vmatprep.subr.mxu0 0.0
    %385 = vmatpush1.msra.mxu0 0.0
    %386 = vmatprep.subr.mxu0 0.0
    %387 = vmatpush1.msra.mxu0 0.0
    %388 = vmatprep.subr.mxu0 0.0
    %389 = vmatpush1.msra.mxu0 0.0
    %390 = vmatprep.subr.mxu0 0.0
    %391 = vmatpush1.msra.mxu0 0.0
    %392 = vmatprep.mubr.f32.mxu0 0.0
    %393 = vmatmul.mubr.f32.gmra.mrb[0].mxu0 %v139
    %v394 = vpop.f32.mrb[0].mxu0
    %v395 = vadd.f32 %v131, %v394
    %v396 = vpop.f32.mrb[0].mxu0
    %397 = vmatprep.mubr.f32.mxu0 0.0
    %398 = vmatmul.mubr.f32.gmra.mrb[0].mxu0 %v142
    %v399 = vpop.f32.mrb[0].mxu0
    %v400 = vadd.f32 %v131, %v399
    %v401 = vpop.f32.mrb[0].mxu0
    %402 = vmatprep.mubr.f32.mxu0 0.0
    %403 = vmatmul.mubr.f32.gmra.mrb[0].mxu0 %v145
    %v404 = vpop.f32.mrb[0].mxu0
    %v405 = vadd.f32 %v131, %v404
    %v406 = vpop.f32.mrb[0].mxu0
    %407 = vmatprep.mubr.f32.mxu0 0.0
    %408 = vmatmul.mubr.f32.gmra.mrb[0].mxu0 %v148
    %v409 = vpop.f32.mrb[0].mxu0
    %v410 = vadd.f32 %v131, %v409
    %v411 = vpop.f32.mrb[0].mxu0
    %412 = vdwg.mxu0
    %v413 = vld [vmem:[%s5] sm:$0xff]
    %v414 = vld [vmem:[%s5 + $0x8] sm:$0xff]
    %v415 = vld [vmem:[%s5 + $0x10] sm:$0xff]
    %v416 = vld [vmem:[%s5 + $0x18] sm:$0xff]
    %v417 = vld [vmem:[#allocation8] sm:$0xff]
    %v418 = vld [vmem:[#allocation8 + $0x8] sm:$0xff]
    %v419 = vld [vmem:[#allocation8 + $0x10] sm:$0xff]
    %v420 = vld [vmem:[#allocation8 + $0x18] sm:$0xff]
    %v421 = vmul.f32 %v217, %v413
    %v422 = vmul.f32 %v223, %v414
    %v423 = vmul.f32 %v229, %v415
    %v424 = vmul.f32 %v235, %v416
    %v425 = vmul.f32 %v219, %v417
    %v426 = vmul.f32 %v225, %v418
    %v427 = vmul.f32 %v231, %v419
    %v428 = vmul.f32 %v237, %v420
    %v429 = vadd.f32 %v421, %v425
    %v430 = vadd.f32 %v422, %v426
    %v431 = vadd.f32 %v423, %v427
    %v432 = vadd.f32 %v424, %v428
    %v433 = vmul.f32 %v306, %v413
    %v434 = vmul.f32 %v312, %v414
    %v435 = vmul.f32 %v318, %v415
    %v436 = vmul.f32 %v324, %v416
    %v437 = vmul.f32 %v308, %v417
    %v438 = vmul.f32 %v314, %v418
    %v439 = vmul.f32 %v320, %v419
    %v440 = vmul.f32 %v326, %v420
    %v441 = vadd.f32 %v433, %v437
    %v442 = vadd.f32 %v434, %v438
    %v443 = vadd.f32 %v435, %v439
    %v444 = vadd.f32 %v436, %v440
    %v445 = vld [vmem:[%s7] sm:$0xff]
    %v446 = vld [vmem:[%s7 + $0x8] sm:$0xff]
    %v447 = vld [vmem:[%s7 + $0x10] sm:$0xff]
    %v448 = vld [vmem:[%s7 + $0x18] sm:$0xff]
    %vm449 = vcmask 130048
    %v451 = vsel %vm449, %v429, 0
    %v454 = vsel %vm449, %v430, 0
    %456 = vmatprep.subr.mxu0 0.0
    %457 = vmatpush1.msra.mxu0 %v441
    %458 = vmatprep.subr.mxu0 0.0
    %459 = vmatpush1.msra.mxu0 %v442
    %460 = vmatprep.subr.mxu0 0.0
    %461 = vmatpush1.msra.mxu0 0.0
    %462 = vmatprep.subr.mxu0 0.0
    %463 = vmatpush1.msra.mxu0 0.0
    %464 = vmatprep.subr.mxu0 0.0
    %465 = vmatpush1.msra.mxu0 0.0
    %466 = vmatprep.subr.mxu0 0.0
    %467 = vmatpush1.msra.mxu0 0.0
    %468 = vmatprep.subr.mxu0 0.0
    %469 = vmatpush1.msra.mxu0 0.0
    %470 = vmatprep.subr.mxu0 0.0
    %471 = vmatpush1.msra.mxu0 0.0
    %472 = vmatprep.subr.mxu0 0.0
    %473 = vmatpush1.msra.mxu0 0.0
    %474 = vmatprep.subr.mxu0 0.0
    %475 = vmatpush1.msra.mxu0 0.0
    %476 = vmatprep.subr.mxu0 0.0
    %477 = vmatpush1.msra.mxu0 0.0
    %478 = vmatprep.subr.mxu0 0.0
    %479 = vmatpush1.msra.mxu0 0.0
    %480 = vmatprep.subr.mxu0 0.0
    %481 = vmatpush1.msra.mxu0 0.0
    %482 = vmatprep.subr.mxu0 0.0
    %483 = vmatpush1.msra.mxu0 0.0
    %484 = vmatprep.subr.mxu0 0.0
    %485 = vmatpush1.msra.mxu0 0.0
    %486 = vmatprep.subr.mxu0 0.0
    %487 = vmatpush1.msra.mxu0 0.0
    %488 = vmatprep.subr.mxu0 0.0
    %489 = vmatpush1.msra.mxu0 0.0
    %490 = vmatprep.subr.mxu0 0.0
    %491 = vmatpush1.msra.mxu0 0.0
    %492 = vmatprep.subr.mxu0 0.0
    %493 = vmatpush1.msra.mxu0 0.0
    %494 = vmatprep.subr.mxu0 0.0
    %495 = vmatpush1.msra.mxu0 0.0
    %496 = vmatprep.subr.mxu0 0.0
    %497 = vmatpush1.msra.mxu0 0.0
    %498 = vmatprep.subr.mxu0 0.0
    %499 = vmatpush1.msra.mxu0 0.0
    %500 = vmatprep.subr.mxu0 0.0
    %501 = vmatpush1.msra.mxu0 0.0
    %502 = vmatprep.subr.mxu0 0.0
    %503 = vmatpush1.msra.mxu0 0.0
    %504 = vmatprep.subr.mxu0 0.0
    %505 = vmatpush1.msra.mxu0 0.0
    %506 = vmatprep.subr.mxu0 0.0
    %507 = vmatpush1.msra.mxu0 0.0
    %508 = vmatprep.subr.mxu0 0.0
    %509 = vmatpush1.msra.mxu0 0.0
    %510 = vmatprep.subr.mxu0 0.0
    %511 = vmatpush1.msra.mxu0 0.0
    %512 = vmatprep.subr.mxu0 0.0
    %513 = vmatpush1.msra.mxu0 0.0
    %514 = vmatprep.subr.mxu0 0.0
    %515 = vmatpush1.msra.mxu0 0.0
    %516 = vmatprep.subr.mxu0 0.0
    %517 = vmatpush1.msra.mxu0 0.0
    %518 = vmatprep.subr.mxu0 0.0
    %519 = vmatpush1.msra.mxu0 0.0
    %520 = vmatprep.mubr.f32.mxu0 0.0
    %521 = vmatmul.mubr.f32.gmra.mrb[0].mxu0 %v451
    %v522 = vpop.f32.mrb[0].mxu0
    %v523 = vadd.f32 %v445, %v522
    %v524 = vpop.f32.mrb[0].mxu0
    %525 = vmatprep.mubr.f32.mxu0 0.0
    %526 = vmatmul.mubr.f32.gmra.mrb[0].mxu0 %v454
    %v527 = vpop.f32.mrb[0].mxu0
    %v528 = vadd.f32 %v446, %v527
    %v529 = vpop.f32.mrb[0].mxu0
    %530 = vdwg.mxu0
    %v531 = vsel %vm449, %v523, -inf
    %532 = vmax.xlane.f32.xlu0 %v531
    %v533 = vpop.xlane.xlu0 %532
    %v534 = vsel %vm449, %v528, -inf
    %535 = vmax.xlane.f32.xlu0 %v534
    %v536 = vpop.xlane.xlu0 %535
    %v537 = vsub.f32 %v523, %v533
    %v538 = vsub.f32 %v528, %v536
    %v539 = vmul.f32 %v537, 1.442695
    %v540 = vpow.pop %v539
    %v541 = vmul.f32 %v538, 1.442695
    %v542 = vpow.pop %v541
    %v543 = vsel %vm449, %v540, 0.0
    %544 = vadd.xlane.f32.xlu0 %v543
    %v545 = vpop.xlane.xlu0 %544
    %v546 = vsel %vm449, %v542, 0.0
    %547 = vadd.xlane.f32.xlu0 %v546
    %v548 = vpop.xlane.xlu0 %547
    %v549 = vrcp.pop %v545
    %v550 = vrcp.pop %v548
    %v551 = vmul.f32 %v540, %v549
    %v552 = vmul.f32 %v542, %v550
    %v554 = vsel %vm449, %v551, 0
    %v557 = vsel %vm449, %v552, 0
    %559 = vmatprep.subr.mxu0 0.0
    %560 = vmatpush1.msra.mxu0 %v395
    %561 = vmatprep.subr.mxu0 0.0
    %562 = vmatpush1.msra.mxu0 %v400
    %563 = vmatprep.subr.mxu0 0.0
    %564 = vmatpush1.msra.mxu0 0.0
    %565 = vmatprep.subr.mxu0 0.0
    %566 = vmatpush1.msra.mxu0 0.0
    %567 = vmatprep.subr.mxu0 0.0
    %568 = vmatpush1.msra.mxu0 0.0
    %569 = vmatprep.subr.mxu0 0.0
    %570 = vmatpush1.msra.mxu0 0.0
    %571 = vmatprep.subr.mxu0 0.0
    %572 = vmatpush1.msra.mxu0 0.0
    %573 = vmatprep.subr.mxu0 0.0
    %574 = vmatpush1.msra.mxu0 0.0
    %575 = vmatprep.subr.mxu0 0.0
    %576 = vmatpush1.msra.mxu0 0.0
    %577 = vmatprep.subr.mxu0 0.0
    %578 = vmatpush1.msra.mxu0 0.0
    %579 = vmatprep.subr.mxu0 0.0
    %580 = vmatpush1.msra.mxu0 0.0
    %581 = vmatprep.subr.mxu0 0.0
    %582 = vmatpush1.msra.mxu0 0.0
    %583 = vmatprep.subr.mxu0 0.0
    %584 = vmatpush1.msra.mxu0 0.0
    %585 = vmatprep.subr.mxu0 0.0
    %586 = vmatpush1.msra.mxu0 0.0
    %587 = vmatprep.subr.mxu0 0.0
    %588 = vmatpush1.msra.mxu0 0.0
    %589 = vmatprep.subr.mxu0 0.0
    %590 = vmatpush1.msra.mxu0 0.0
    %591 = vmatprep.subr.mxu0 0.0
    %592 = vmatpush1.msra.mxu0 0.0
    %593 = vmatprep.subr.mxu0 0.0
    %594 = vmatpush1.msra.mxu0 0.0
    %595 = vmatprep.subr.mxu0 0.0
    %596 = vmatpush1.msra.mxu0 0.0
    %597 = vmatprep.subr.mxu0 0.0
    %598 = vmatpush1.msra.mxu0 0.0
    %599 = vmatprep.subr.mxu0 0.0
    %600 = vmatpush1.msra.mxu0 0.0
    %601 = vmatprep.subr.mxu0 0.0
    %602 = vmatpush1.msra.mxu0 0.0
    %603 = vmatprep.subr.mxu0 0.0
    %604 = vmatpush1.msra.mxu0 0.0
    %605 = vmatprep.subr.mxu0 0.0
    %606 = vmatpush1.msra.mxu0 0.0
    %607 = vmatprep.subr.mxu0 0.0
    %608 = vmatpush1.msra.mxu0 0.0
    %609 = vmatprep.subr.mxu0 0.0
    %610 = vmatpush1.msra.mxu0 0.0
    %611 = vmatprep.subr.mxu0 0.0
    %612 = vmatpush1.msra.mxu0 0.0
    %613 = vmatprep.subr.mxu0 0.0
    %614 = vmatpush1.msra.mxu0 0.0
    %615 = vmatprep.subr.mxu0 0.0
    %616 = vmatpush1.msra.mxu0 0.0
    %617 = vmatprep.subr.mxu0 0.0
    %618 = vmatpush1.msra.mxu0 0.0
    %619 = vmatprep.subr.mxu0 0.0
    %620 = vmatpush1.msra.mxu0 0.0
    %621 = vmatprep.subr.mxu0 0.0
    %622 = vmatpush1.msra.mxu0 0.0
    %623 = vmatprep.mubr.f32.mxu0 0.0
    %624 = vmatmul.mubr.f32.gmra.mrb[0].mxu0 %v554
    %v625 = vpop.f32.mrb[0].mxu0
    %v626 = vadd.f32 0.0, %v625
    %v627 = vpop.f32.mrb[0].mxu0
    %628 = vmatprep.mubr.f32.mxu0 0.0
    %629 = vmatmul.mubr.f32.gmra.mrb[0].mxu0 %v557
    %v630 = vpop.f32.mrb[0].mxu0
    %v631 = vadd.f32 0.0, %v630
    %v632 = vpop.f32.mrb[0].mxu0
    %633 = vdwg.mxu0
    %634 = vrot.lane.b32.xlu0 %v429, 112
    %v635 = vpop.permute.xlu0 %634
    %636 = vrot.lane.b32.xlu0 %v430, 112
    %v637 = vpop.permute.xlu0 %636
    %640 = vrot.lane.b32.xlu0 %v441, 112
    %v641 = vpop.permute.xlu0 %640
    %642 = vrot.lane.b32.xlu0 %v442, 112
    %v643 = vpop.permute.xlu0 %642
    %v646 = vsel %vm449, %v635, 0
    %v648 = vsel %vm449, %v637, 0
    %650 = vmatprep.subr.mxu0 0.0
    %651 = vmatpush1.msra.mxu0 %v641
    %652 = vmatprep.subr.mxu0 0.0
    %653 = vmatpush1.msra.mxu0 %v643
    %654 = vmatprep.subr.mxu0 0.0
    %655 = vmatpush1.msra.mxu0 0.0
    %656 = vmatprep.subr.mxu0 0.0
    %657 = vmatpush1.msra.mxu0 0.0
    %658 = vmatprep.subr.mxu0 0.0
    %659 = vmatpush1.msra.mxu0 0.0
    %660 = vmatprep.subr.mxu0 0.0
    %661 = vmatpush1.msra.mxu0 0.0
    %662 = vmatprep.subr.mxu0 0.0
    %663 = vmatpush1.msra.mxu0 0.0
    %664 = vmatprep.subr.mxu0 0.0
    %665 = vmatpush1.msra.mxu0 0.0
    %666 = vmatprep.subr.mxu0 0.0
    %667 = vmatpush1.msra.mxu0 0.0
    %668 = vmatprep.subr.mxu0 0.0
    %669 = vmatpush1.msra.mxu0 0.0
    %670 = vmatprep.subr.mxu0 0.0
    %671 = vmatpush1.msra.mxu0 0.0
    %672 = vmatprep.subr.mxu0 0.0
    %673 = vmatpush1.msra.mxu0 0.0
    %674 = vmatprep.subr.mxu0 0.0
    %675 = vmatpush1.msra.mxu0 0.0
    %676 = vmatprep.subr.mxu0 0.0
    %677 = vmatpush1.msra.mxu0 0.0
    %678 = vmatprep.subr.mxu0 0.0
    %679 = vmatpush1.msra.mxu0 0.0
    %680 = vmatprep.subr.mxu0 0.0
    %681 = vmatpush1.msra.mxu0 0.0
    %682 = vmatprep.subr.mxu0 0.0
    %683 = vmatpush1.msra.mxu0 0.0
    %684 = vmatprep.subr.mxu0 0.0
    %685 = vmatpush1.msra.mxu0 0.0
    %686 = vmatprep.subr.mxu0 0.0
    %687 = vmatpush1.msra.mxu0 0.0
    %688 = vmatprep.subr.mxu0 0.0
    %689 = vmatpush1.msra.mxu0 0.0
    %690 = vmatprep.subr.mxu0 0.0
    %691 = vmatpush1.msra.mxu0 0.0
    %692 = vmatprep.subr.mxu0 0.0
    %693 = vmatpush1.msra.mxu0 0.0
    %694 = vmatprep.subr.mxu0 0.0
    %695 = vmatpush1.msra.mxu0 0.0
    %696 = vmatprep.subr.mxu0 0.0
    %697 = vmatpush1.msra.mxu0 0.0
    %698 = vmatprep.subr.mxu0 0.0
    %699 = vmatpush1.msra.mxu0 0.0
    %700 = vmatprep.subr.mxu0 0.0
    %701 = vmatpush1.msra.mxu0 0.0
    %702 = vmatprep.subr.mxu0 0.0
    %703 = vmatpush1.msra.mxu0 0.0
    %704 = vmatprep.subr.mxu0 0.0
    %705 = vmatpush1.msra.mxu0 0.0
    %706 = vmatprep.subr.mxu0 0.0
    %707 = vmatpush1.msra.mxu0 0.0
    %708 = vmatprep.subr.mxu0 0.0
    %709 = vmatpush1.msra.mxu0 0.0
    %710 = vmatprep.subr.mxu0 0.0
    %711 = vmatpush1.msra.mxu0 0.0
    %712 = vmatprep.subr.mxu0 0.0
    %713 = vmatpush1.msra.mxu0 0.0
    %714 = vmatprep.mubr.f32.mxu0 0.0
    %715 = vmatmul.mubr.f32.gmra.mrb[0].mxu0 %v646
    %v716 = vpop.f32.mrb[0].mxu0
    %v717 = vadd.f32 %v445, %v716
    %v718 = vpop.f32.mrb[0].mxu0
    %719 = vmatprep.mubr.f32.mxu0 0.0
    %720 = vmatmul.mubr.f32.gmra.mrb[0].mxu0 %v648
    %v721 = vpop.f32.mrb[0].mxu0
    %v722 = vadd.f32 %v446, %v721
    %v723 = vpop.f32.mrb[0].mxu0
    %724 = vdwg.mxu0
    %v725 = vsel %vm449, %v717, -inf
    %726 = vmax.xlane.f32.xlu0 %v725
    %v727 = vpop.xlane.xlu0 %726
    %v728 = vsel %vm449, %v722, -inf
    %729 = vmax.xlane.f32.xlu0 %v728
    %v730 = vpop.xlane.xlu0 %729
    %v731 = vsub.f32 %v717, %v727
    %v732 = vsub.f32 %v722, %v730
    %v733 = vmul.f32 %v731, 1.442695
    %v734 = vpow.pop %v733
    %v735 = vmul.f32 %v732, 1.442695
    %v736 = vpow.pop %v735
    %v737 = vsel %vm449, %v734, 0.0
    %738 = vadd.xlane.f32.xlu0 %v737
    %v739 = vpop.xlane.xlu0 %738
    %v740 = vsel %vm449, %v736, 0.0
    %741 = vadd.xlane.f32.xlu0 %v740
    %v742 = vpop.xlane.xlu0 %741
    %v743 = vrcp.pop %v739
    %v744 = vrcp.pop %v742
    %v745 = vmul.f32 %v734, %v743
    %v746 = vmul.f32 %v736, %v744
    %749 = vrot.lane.b32.xlu0 %v395, 112
    %v750 = vpop.permute.xlu0 %749
    %751 = vrot.lane.b32.xlu0 %v400, 112
    %v752 = vpop.permute.xlu0 %751
    %v756 = vsel %vm449, %v745, 0
    %v759 = vsel %vm449, %v746, 0
    %761 = vmatprep.subr.mxu0 0.0
    %762 = vmatpush1.msra.mxu0 %v750
    %763 = vmatprep.subr.mxu0 0.0
    %764 = vmatpush1.msra.mxu0 %v752
    %765 = vmatprep.subr.mxu0 0.0
    %766 = vmatpush1.msra.mxu0 0.0
    %767 = vmatprep.subr.mxu0 0.0
    %768 = vmatpush1.msra.mxu0 0.0
    %769 = vmatprep.subr.mxu0 0.0
    %770 = vmatpush1.msra.mxu0 0.0
    %771 = vmatprep.subr.mxu0 0.0
    %772 = vmatpush1.msra.mxu0 0.0
    %773 = vmatprep.subr.mxu0 0.0
    %774 = vmatpush1.msra.mxu0 0.0
    %775 = vmatprep.subr.mxu0 0.0
    %776 = vmatpush1.msra.mxu0 0.0
    %777 = vmatprep.subr.mxu0 0.0
    %778 = vmatpush1.msra.mxu0 0.0
    %779 = vmatprep.subr.mxu0 0.0
    %780 = vmatpush1.msra.mxu0 0.0
    %781 = vmatprep.subr.mxu0 0.0
    %782 = vmatpush1.msra.mxu0 0.0
    %783 = vmatprep.subr.mxu0 0.0
    %784 = vmatpush1.msra.mxu0 0.0
    %785 = vmatprep.subr.mxu0 0.0
    %786 = vmatpush1.msra.mxu0 0.0
    %787 = vmatprep.subr.mxu0 0.0
    %788 = vmatpush1.msra.mxu0 0.0
    %789 = vmatprep.subr.mxu0 0.0
    %790 = vmatpush1.msra.mxu0 0.0
    %791 = vmatprep.subr.mxu0 0.0
    %792 = vmatpush1.msra.mxu0 0.0
    %793 = vmatprep.subr.mxu0 0.0
    %794 = vmatpush1.msra.mxu0 0.0
    %795 = vmatprep.subr.mxu0 0.0
    %796 = vmatpush1.msra.mxu0 0.0
    %797 = vmatprep.subr.mxu0 0.0
    %798 = vmatpush1.msra.mxu0 0.0
    %799 = vmatprep.subr.mxu0 0.0
    %800 = vmatpush1.msra.mxu0 0.0
    %801 = vmatprep.subr.mxu0 0.0
    %802 = vmatpush1.msra.mxu0 0.0
    %803 = vmatprep.subr.mxu0 0.0
    %804 = vmatpush1.msra.mxu0 0.0
    %805 = vmatprep.subr.mxu0 0.0
    %806 = vmatpush1.msra.mxu0 0.0
    %807 = vmatprep.subr.mxu0 0.0
    %808 = vmatpush1.msra.mxu0 0.0
    %809 = vmatprep.subr.mxu0 0.0
    %810 = vmatpush1.msra.mxu0 0.0
    %811 = vmatprep.subr.mxu0 0.0
    %812 = vmatpush1.msra.mxu0 0.0
    %813 = vmatprep.subr.mxu0 0.0
    %814 = vmatpush1.msra.mxu0 0.0
    %815 = vmatprep.subr.mxu0 0.0
    %816 = vmatpush1.msra.mxu0 0.0
    %817 = vmatprep.subr.mxu0 0.0
    %818 = vmatpush1.msra.mxu0 0.0
    %819 = vmatprep.subr.mxu0 0.0
    %820 = vmatpush1.msra.mxu0 0.0
    %821 = vmatprep.subr.mxu0 0.0
    %822 = vmatpush1.msra.mxu0 0.0
    %823 = vmatprep.subr.mxu0 0.0
    %824 = vmatpush1.msra.mxu0 0.0
    %825 = vmatprep.mubr.f32.mxu0 0.0
    %826 = vmatmul.mubr.f32.gmra.mrb[0].mxu0 %v756
    %v827 = vpop.f32.mrb[0].mxu0
    %v828 = vadd.f32 0.0, %v827
    %v829 = vpop.f32.mrb[0].mxu0
    %830 = vmatprep.mubr.f32.mxu0 0.0
    %831 = vmatmul.mubr.f32.gmra.mrb[0].mxu0 %v759
    %v832 = vpop.f32.mrb[0].mxu0
    %v833 = vadd.f32 0.0, %v832
    %v834 = vpop.f32.mrb[0].mxu0
    %835 = vdwg.mxu0
    %836 = vrot.lane.b32.xlu0 %v745, 16
    %v837 = vpop.permute.xlu0 %836
    %838 = vrot.lane.b32.xlu0 %v746, 16
    %v839 = vpop.permute.xlu0 %838
    %v842 = vsel %vm449, %v551, %v837
    %v843 = vsel %vm449, %v552, %v839
    %846 = vrot.lane.b32.xlu0 %v828, 16
    %v847 = vpop.permute.xlu0 %846
    %848 = vrot.lane.b32.xlu0 %v833, 16
    %v849 = vpop.permute.xlu0 %848
    %v852 = vsel %vm449, %v626, %v847
    %v853 = vsel %vm449, %v631, %v849
    %v855 = vsel %vm449, %v431, 0
    %v858 = vsel %vm449, %v432, 0
    %860 = vmatprep.subr.mxu0 0.0
    %861 = vmatpush1.msra.mxu0 %v443
    %862 = vmatprep.subr.mxu0 0.0
    %863 = vmatpush1.msra.mxu0 %v444
    %864 = vmatprep.subr.mxu0 0.0
    %865 = vmatpush1.msra.mxu0 0.0
    %866 = vmatprep.subr.mxu0 0.0
    %867 = vmatpush1.msra.mxu0 0.0
    %868 = vmatprep.subr.mxu0 0.0
    %869 = vmatpush1.msra.mxu0 0.0
    %870 = vmatprep.subr.mxu0 0.0
    %871 = vmatpush1.msra.mxu0 0.0
    %872 = vmatprep.subr.mxu0 0.0
    %873 = vmatpush1.msra.mxu0 0.0
    %874 = vmatprep.subr.mxu0 0.0
    %875 = vmatpush1.msra.mxu0 0.0
    %876 = vmatprep.subr.mxu0 0.0
    %877 = vmatpush1.msra.mxu0 0.0
    %878 = vmatprep.subr.mxu0 0.0
    %879 = vmatpush1.msra.mxu0 0.0
    %880 = vmatprep.subr.mxu0 0.0
    %881 = vmatpush1.msra.mxu0 0.0
    %882 = vmatprep.subr.mxu0 0.0
    %883 = vmatpush1.msra.mxu0 0.0
    %884 = vmatprep.subr.mxu0 0.0
    %885 = vmatpush1.msra.mxu0 0.0
    %886 = vmatprep.subr.mxu0 0.0
    %887 = vmatpush1.msra.mxu0 0.0
    %888 = vmatprep.subr.mxu0 0.0
    %889 = vmatpush1.msra.mxu0 0.0
    %890 = vmatprep.subr.mxu0 0.0
    %891 = vmatpush1.msra.mxu0 0.0
    %892 = vmatprep.subr.mxu0 0.0
    %893 = vmatpush1.msra.mxu0 0.0
    %894 = vmatprep.subr.mxu0 0.0
    %895 = vmatpush1.msra.mxu0 0.0
    %896 = vmatprep.subr.mxu0 0.0
    %897 = vmatpush1.msra.mxu0 0.0
    %898 = vmatprep.subr.mxu0 0.0
    %899 = vmatpush1.msra.mxu0 0.0
    %900 = vmatprep.subr.mxu0 0.0
    %901 = vmatpush1.msra.mxu0 0.0
    %902 = vmatprep.subr.mxu0 0.0
    %903 = vmatpush1.msra.mxu0 0.0
    %904 = vmatprep.subr.mxu0 0.0
    %905 = vmatpush1.msra.mxu0 0.0
    %906 = vmatprep.subr.mxu0 0.0
    %907 = vmatpush1.msra.mxu0 0.0
    %908 = vmatprep.subr.mxu0 0.0
    %909 = vmatpush1.msra.mxu0 0.0
    %910 = vmatprep.subr.mxu0 0.0
    %911 = vmatpush1.msra.mxu0 0.0
    %912 = vmatprep.subr.mxu0 0.0
    %913 = vmatpush1.msra.mxu0 0.0
    %914 = vmatprep.subr.mxu0 0.0
    %915 = vmatpush1.msra.mxu0 0.0
    %916 = vmatprep.subr.mxu0 0.0
    %917 = vmatpush1.msra.mxu0 0.0
    %918 = vmatprep.subr.mxu0 0.0
    %919 = vmatpush1.msra.mxu0 0.0
    %920 = vmatprep.subr.mxu0 0.0
    %921 = vmatpush1.msra.mxu0 0.0
    %922 = vmatprep.subr.mxu0 0.0
    %923 = vmatpush1.msra.mxu0 0.0
    %924 = vmatprep.mubr.f32.mxu0 0.0
    %925 = vmatmul.mubr.f32.gmra.mrb[0].mxu0 %v855
    %v926 = vpop.f32.mrb[0].mxu0
    %v927 = vadd.f32 %v447, %v926
    %v928 = vpop.f32.mrb[0].mxu0
    %929 = vmatprep.mubr.f32.mxu0 0.0
    %930 = vmatmul.mubr.f32.gmra.mrb[0].mxu0 %v858
    %v931 = vpop.f32.mrb[0].mxu0
    %v932 = vadd.f32 %v448, %v931
    %v933 = vpop.f32.mrb[0].mxu0
    %934 = vdwg.mxu0
    %v935 = vsel %vm449, %v927, -inf
    %936 = vmax.xlane.f32.xlu0 %v935
    %v937 = vpop.xlane.xlu0 %936
    %v938 = vsel %vm449, %v932, -inf
    %939 = vmax.xlane.f32.xlu0 %v938
    %v940 = vpop.xlane.xlu0 %939
    %v941 = vsub.f32 %v927, %v937
    %v942 = vsub.f32 %v932, %v940
    %v943 = vmul.f32 %v941, 1.442695
    %v944 = vpow.pop %v943
    %v945 = vmul.f32 %v942, 1.442695
    %v946 = vpow.pop %v945
    %v947 = vsel %vm449, %v944, 0.0
    %948 = vadd.xlane.f32.xlu0 %v947
    %v949 = vpop.xlane.xlu0 %948
    %v950 = vsel %vm449, %v946, 0.0
    %951 = vadd.xlane.f32.xlu0 %v950
    %v952 = vpop.xlane.xlu0 %951
    %v953 = vrcp.pop %v949
    %v954 = vrcp.pop %v952
    %v955 = vmul.f32 %v944, %v953
    %v956 = vmul.f32 %v946, %v954
    %v958 = vsel %vm449, %v955, 0
    %v961 = vsel %vm449, %v956, 0
    %963 = vmatprep.subr.mxu0 0.0
    %964 = vmatpush1.msra.mxu0 %v405
    %965 = vmatprep.subr.mxu0 0.0
    %966 = vmatpush1.msra.mxu0 %v410
    %967 = vmatprep.subr.mxu0 0.0
    %968 = vmatpush1.msra.mxu0 0.0
    %969 = vmatprep.subr.mxu0 0.0
    %970 = vmatpush1.msra.mxu0 0.0
    %971 = vmatprep.subr.mxu0 0.0
    %972 = vmatpush1.msra.mxu0 0.0
    %973 = vmatprep.subr.mxu0 0.0
    %974 = vmatpush1.msra.mxu0 0.0
    %975 = vmatprep.subr.mxu0 0.0
    %976 = vmatpush1.msra.mxu0 0.0
    %977 = vmatprep.subr.mxu0 0.0
    %978 = vmatpush1.msra.mxu0 0.0
    %979 = vmatprep.subr.mxu0 0.0
    %980 = vmatpush1.msra.mxu0 0.0
    %981 = vmatprep.subr.mxu0 0.0
    %982 = vmatpush1.msra.mxu0 0.0
    %983 = vmatprep.subr.mxu0 0.0
    %984 = vmatpush1.msra.mxu0 0.0
    %985 = vmatprep.subr.mxu0 0.0
    %986 = vmatpush1.msra.mxu0 0.0
    %987 = vmatprep.subr.mxu0 0.0
    %988 = vmatpush1.msra.mxu0 0.0
    %989 = vmatprep.subr.mxu0 0.0
    %990 = vmatpush1.msra.mxu0 0.0
    %991 = vmatprep.subr.mxu0 0.0
    %992 = vmatpush1.msra.mxu0 0.0
    %993 = vmatprep.subr.mxu0 0.0
    %994 = vmatpush1.msra.mxu0 0.0
    %995 = vmatprep.subr.mxu0 0.0
    %996 = vmatpush1.msra.mxu0 0.0
    %997 = vmatprep.subr.mxu0 0.0
    %998 = vmatpush1.msra.mxu0 0.0
    %999 = vmatprep.subr.mxu0 0.0
    %1000 = vmatpush1.msra.mxu0 0.0
    %1001 = vmatprep.subr.mxu0 0.0
    %1002 = vmatpush1.msra.mxu0 0.0
    %1003 = vmatprep.subr.mxu0 0.0
    %1004 = vmatpush1.msra.mxu0 0.0
    %1005 = vmatprep.subr.mxu0 0.0
    %1006 = vmatpush1.msra.mxu0 0.0
    %1007 = vmatprep.subr.mxu0 0.0
    %1008 = vmatpush1.msra.mxu0 0.0
    %1009 = vmatprep.subr.mxu0 0.0
    %1010 = vmatpush1.msra.mxu0 0.0
    %1011 = vmatprep.subr.mxu0 0.0
    %1012 = vmatpush1.msra.mxu0 0.0
    %1013 = vmatprep.subr.mxu0 0.0
    %1014 = vmatpush1.msra.mxu0 0.0
    %1015 = vmatprep.subr.mxu0 0.0
    %1016 = vmatpush1.msra.mxu0 0.0
    %1017 = vmatprep.subr.mxu0 0.0
    %1018 = vmatpush1.msra.mxu0 0.0
    %1019 = vmatprep.subr.mxu0 0.0
    %1020 = vmatpush1.msra.mxu0 0.0
    %1021 = vmatprep.subr.mxu0 0.0
    %1022 = vmatpush1.msra.mxu0 0.0
    %1023 = vmatprep.subr.mxu0 0.0
    %1024 = vmatpush1.msra.mxu0 0.0
    %1025 = vmatprep.subr.mxu0 0.0
    %1026 = vmatpush1.msra.mxu0 0.0
    %1027 = vmatprep.mubr.f32.mxu0 0.0
    %1028 = vmatmul.mubr.f32.gmra.mrb[0].mxu0 %v958
    %v1029 = vpop.f32.mrb[0].mxu0
    %v1030 = vadd.f32 0.0, %v1029
    %v1031 = vpop.f32.mrb[0].mxu0
    %1032 = vmatprep.mubr.f32.mxu0 0.0
    %1033 = vmatmul.mubr.f32.gmra.mrb[0].mxu0 %v961
    %v1034 = vpop.f32.mrb[0].mxu0
    %v1035 = vadd.f32 0.0, %v1034
    %v1036 = vpop.f32.mrb[0].mxu0
    %1037 = vdwg.mxu0
    %1038 = vrot.lane.b32.xlu0 %v431, 112
    %v1039 = vpop.permute.xlu0 %1038
    %1040 = vrot.lane.b32.xlu0 %v432, 112
    %v1041 = vpop.permute.xlu0 %1040
    %1044 = vrot.lane.b32.xlu0 %v443, 112
    %v1045 = vpop.permute.xlu0 %1044
    %1046 = vrot.lane.b32.xlu0 %v444, 112
    %v1047 = vpop.permute.xlu0 %1046
    %v1050 = vsel %vm449, %v1039, 0
    %v1052 = vsel %vm449, %v1041, 0
    %1054 = vmatprep.subr.mxu0 0.0
    %1055 = vmatpush1.msra.mxu0 %v1045
    %1056 = vmatprep.subr.mxu0 0.0
    %1057 = vmatpush1.msra.mxu0 %v1047
    %1058 = vmatprep.subr.mxu0 0.0
    %1059 = vmatpush1.msra.mxu0 0.0
    %1060 = vmatprep.subr.mxu0 0.0
    %1061 = vmatpush1.msra.mxu0 0.0
    %1062 = vmatprep.subr.mxu0 0.0
    %1063 = vmatpush1.msra.mxu0 0.0
    %1064 = vmatprep.subr.mxu0 0.0
    %1065 = vmatpush1.msra.mxu0 0.0
    %1066 = vmatprep.subr.mxu0 0.0
    %1067 = vmatpush1.msra.mxu0 0.0
    %1068 = vmatprep.subr.mxu0 0.0
    %1069 = vmatpush1.msra.mxu0 0.0
    %1070 = vmatprep.subr.mxu0 0.0
    %1071 = vmatpush1.msra.mxu0 0.0
    %1072 = vmatprep.subr.mxu0 0.0
    %1073 = vmatpush1.msra.mxu0 0.0
    %1074 = vmatprep.subr.mxu0 0.0
    %1075 = vmatpush1.msra.mxu0 0.0
    %1076 = vmatprep.subr.mxu0 0.0
    %1077 = vmatpush1.msra.mxu0 0.0
    %1078 = vmatprep.subr.mxu0 0.0
    %1079 = vmatpush1.msra.mxu0 0.0
    %1080 = vmatprep.subr.mxu0 0.0
    %1081 = vmatpush1.msra.mxu0 0.0
    %1082 = vmatprep.subr.mxu0 0.0
    %1083 = vmatpush1.msra.mxu0 0.0
    %1084 = vmatprep.subr.mxu0 0.0
    %1085 = vmatpush1.msra.mxu0 0.0
    %1086 = vmatprep.subr.mxu0 0.0
    %1087 = vmatpush1.msra.mxu0 0.0
    %1088 = vmatprep.subr.mxu0 0.0
    %1089 = vmatpush1.msra.mxu0 0.0
    %1090 = vmatprep.subr.mxu0 0.0
    %1091 = vmatpush1.msra.mxu0 0.0
    %1092 = vmatprep.subr.mxu0 0.0
    %1093 = vmatpush1.msra.mxu0 0.0
    %1094 = vmatprep.subr.mxu0 0.0
    %1095 = vmatpush1.msra.mxu0 0.0
    %1096 = vmatprep.subr.mxu0 0.0
    %1097 = vmatpush1.msra.mxu0 0.0
    %1098 = vmatprep.subr.mxu0 0.0
    %1099 = vmatpush1.msra.mxu0 0.0
    %1100 = vmatprep.subr.mxu0 0.0
    %1101 = vmatpush1.msra.mxu0 0.0
    %1102 = vmatprep.subr.mxu0 0.0
    %1103 = vmatpush1.msra.mxu0 0.0
    %1104 = vmatprep.subr.mxu0 0.0
    %1105 = vmatpush1.msra.mxu0 0.0
    %1106 = vmatprep.subr.mxu0 0.0
    %1107 = vmatpush1.msra.mxu0 0.0
    %1108 = vmatprep.subr.mxu0 0.0
    %1109 = vmatpush1.msra.mxu0 0.0
    %1110 = vmatprep.subr.mxu0 0.0
    %1111 = vmatpush1.msra.mxu0 0.0
    %1112 = vmatprep.subr.mxu0 0.0
    %1113 = vmatpush1.msra.mxu0 0.0
    %1114 = vmatprep.subr.mxu0 0.0
    %1115 = vmatpush1.msra.mxu0 0.0
    %1116 = vmatprep.subr.mxu0 0.0
    %1117 = vmatpush1.msra.mxu0 0.0
    %1118 = vmatprep.mubr.f32.mxu0 0.0
    %1119 = vmatmul.mubr.f32.gmra.mrb[0].mxu0 %v1050
    %v1120 = vpop.f32.mrb[0].mxu0
    %v1121 = vadd.f32 %v447, %v1120
    %v1122 = vpop.f32.mrb[0].mxu0
    %1123 = vmatprep.mubr.f32.mxu0 0.0
    %1124 = vmatmul.mubr.f32.gmra.mrb[0].mxu0 %v1052
    %v1125 = vpop.f32.mrb[0].mxu0
    %v1126 = vadd.f32 %v448, %v1125
    %v1127 = vpop.f32.mrb[0].mxu0
    %1128 = vdwg.mxu0
    %v1129 = vsel %vm449, %v1121, -inf
    %1130 = vmax.xlane.f32.xlu0 %v1129
    %v1131 = vpop.xlane.xlu0 %1130
    %v1132 = vsel %vm449, %v1126, -inf
    %1133 = vmax.xlane.f32.xlu0 %v1132
    %v1134 = vpop.xlane.xlu0 %1133
    %v1135 = vsub.f32 %v1121, %v1131
    %v1136 = vsub.f32 %v1126, %v1134
    %v1137 = vmul.f32 %v1135, 1.442695
    %v1138 = vpow.pop %v1137
    %v1139 = vmul.f32 %v1136, 1.442695
    %v1140 = vpow.pop %v1139
    %v1141 = vsel %vm449, %v1138, 0.0
    %1142 = vadd.xlane.f32.xlu0 %v1141
    %v1143 = vpop.xlane.xlu0 %1142
    %v1144 = vsel %vm449, %v1140, 0.0
    %1145 = vadd.xlane.f32.xlu0 %v1144
    %v1146 = vpop.xlane.xlu0 %1145
    %v1147 = vrcp.pop %v1143
    %v1148 = vrcp.pop %v1146
    %v1149 = vmul.f32 %v1138, %v1147
    %v1150 = vmul.f32 %v1140, %v1148
    %1153 = vrot.lane.b32.xlu0 %v405, 112
    %v1154 = vpop.permute.xlu0 %1153
    %1155 = vrot.lane.b32.xlu0 %v410, 112
    %v1156 = vpop.permute.xlu0 %1155
    %v1160 = vsel %vm449, %v1149, 0
    %v1163 = vsel %vm449, %v1150, 0
    %1165 = vmatprep.subr.mxu0 0.0
    %1166 = vmatpush1.msra.mxu0 %v1154
    %1167 = vmatprep.subr.mxu0 0.0
    %1168 = vmatpush1.msra.mxu0 %v1156
    %1169 = vmatprep.subr.mxu0 0.0
    %1170 = vmatpush1.msra.mxu0 0.0
    %1171 = vmatprep.subr.mxu0 0.0
    %1172 = vmatpush1.msra.mxu0 0.0
    %1173 = vmatprep.subr.mxu0 0.0
    %1174 = vmatpush1.msra.mxu0 0.0
    %1175 = vmatprep.subr.mxu0 0.0
    %1176 = vmatpush1.msra.mxu0 0.0
    %1177 = vmatprep.subr.mxu0 0.0
    %1178 = vmatpush1.msra.mxu0 0.0
    %1179 = vmatprep.subr.mxu0 0.0
    %1180 = vmatpush1.msra.mxu0 0.0
    %1181 = vmatprep.subr.mxu0 0.0
    %1182 = vmatpush1.msra.mxu0 0.0
    %1183 = vmatprep.subr.mxu0 0.0
    %1184 = vmatpush1.msra.mxu0 0.0
    %1185 = vmatprep.subr.mxu0 0.0
    %1186 = vmatpush1.msra.mxu0 0.0
    %1187 = vmatprep.subr.mxu0 0.0
    %1188 = vmatpush1.msra.mxu0 0.0
    %1189 = vmatprep.subr.mxu0 0.0
    %1190 = vmatpush1.msra.mxu0 0.0
    %1191 = vmatprep.subr.mxu0 0.0
    %1192 = vmatpush1.msra.mxu0 0.0
    %1193 = vmatprep.subr.mxu0 0.0
    %1194 = vmatpush1.msra.mxu0 0.0
    %1195 = vmatprep.subr.mxu0 0.0
    %1196 = vmatpush1.msra.mxu0 0.0
    %1197 = vmatprep.subr.mxu0 0.0
    %1198 = vmatpush1.msra.mxu0 0.0
    %1199 = vmatprep.subr.mxu0 0.0
    %1200 = vmatpush1.msra.mxu0 0.0
    %1201 = vmatprep.subr.mxu0 0.0
    %1202 = vmatpush1.msra.mxu0 0.0
    %1203 = vmatprep.subr.mxu0 0.0
    %1204 = vmatpush1.msra.mxu0 0.0
    %1205 = vmatprep.subr.mxu0 0.0
    %1206 = vmatpush1.msra.mxu0 0.0
    %1207 = vmatprep.subr.mxu0 0.0
    %1208 = vmatpush1.msra.mxu0 0.0
    %1209 = vmatprep.subr.mxu0 0.0
    %1210 = vmatpush1.msra.mxu0 0.0
    %1211 = vmatprep.subr.mxu0 0.0
    %1212 = vmatpush1.msra.mxu0 0.0
    %1213 = vmatprep.subr.mxu0 0.0
    %1214 = vmatpush1.msra.mxu0 0.0
    %1215 = vmatprep.subr.mxu0 0.0
    %1216 = vmatpush1.msra.mxu0 0.0
    %1217 = vmatprep.subr.mxu0 0.0
    %1218 = vmatpush1.msra.mxu0 0.0
    %1219 = vmatprep.subr.mxu0 0.0
    %1220 = vmatpush1.msra.mxu0 0.0
    %1221 = vmatprep.subr.mxu0 0.0
    %1222 = vmatpush1.msra.mxu0 0.0
    %1223 = vmatprep.subr.mxu0 0.0
    %1224 = vmatpush1.msra.mxu0 0.0
    %1225 = vmatprep.subr.mxu0 0.0
    %1226 = vmatpush1.msra.mxu0 0.0
    %1227 = vmatprep.subr.mxu0 0.0
    %1228 = vmatpush1.msra.mxu0 0.0
    %1229 = vmatprep.mubr.f32.mxu0 0.0
    %1230 = vmatmul.mubr.f32.gmra.mrb[0].mxu0 %v1160
    %v1231 = vpop.f32.mrb[0].mxu0
    %v1232 = vadd.f32 0.0, %v1231
    %v1233 = vpop.f32.mrb[0].mxu0
    %1234 = vmatprep.mubr.f32.mxu0 0.0
    %1235 = vmatmul.mubr.f32.gmra.mrb[0].mxu0 %v1163
    %v1236 = vpop.f32.mrb[0].mxu0
    %v1237 = vadd.f32 0.0, %v1236
    %v1238 = vpop.f32.mrb[0].mxu0
    %1239 = vdwg.mxu0
    %1240 = vrot.lane.b32.xlu0 %v1149, 16
    %v1241 = vpop.permute.xlu0 %1240
    %1242 = vrot.lane.b32.xlu0 %v1150, 16
    %v1243 = vpop.permute.xlu0 %1242
    %v1246 = vsel %vm449, %v955, %v1241
    %v1247 = vsel %vm449, %v956, %v1243
    %1250 = vrot.lane.b32.xlu0 %v1232, 16
    %v1251 = vpop.permute.xlu0 %1250
    %1252 = vrot.lane.b32.xlu0 %v1237, 16
    %v1253 = vpop.permute.xlu0 %1252
    %v1256 = vsel %vm449, %v1030, %v1251
    %v1257 = vsel %vm449, %v1035, %v1253
    %v1258 = vld [vmem:[#allocation7] sm:$0xff]
    %v1259 = vld [vmem:[#allocation7 + $0x8] sm:$0xff]
    %v1260 = vld [vmem:[#allocation7 + $0x10] sm:$0xff]
    %v1261 = vld [vmem:[#allocation7 + $0x18] sm:$0xff]
    %v1262 = vld [vmem:[%s4] sm:$0x1]
    %v1264 = vlaneseq
    %v1265 = vshrl.u32 %v1264, 7
    %v1266 = vsub.s32 0, %v1265
    %v1267 = vrot.slane %v1262, %v1266
    %v1270 = vsel %vm137, %v852, 0
    %v1273 = vsel %vm137, %v853, 0
    %v1276 = vsel %vm137, %v1256, 0
    %v1279 = vsel %vm137, %v1257, 0
    %1281 = vmatprep.subr.mxu0 0.0
    %1282 = vmatpush1.msra.mxu0 %v1258
    %1283 = vmatprep.subr.mxu0 0.0
    %1284 = vmatpush1.msra.mxu0 %v1259
    %1285 = vmatprep.subr.mxu0 0.0
    %1286 = vmatpush1.msra.mxu0 %v1260
    %1287 = vmatprep.subr.mxu0 0.0
    %1288 = vmatpush1.msra.mxu0 %v1261
    %1289 = vmatprep.subr.mxu0 0.0
    %1290 = vmatpush1.msra.mxu0 0.0
    %1291 = vmatprep.subr.mxu0 0.0
    %1292 = vmatpush1.msra.mxu0 0.0
    %1293 = vmatprep.subr.mxu0 0.0
    %1294 = vmatpush1.msra.mxu0 0.0
    %1295 = vmatprep.subr.mxu0 0.0
    %1296 = vmatpush1.msra.mxu0 0.0
    %1297 = vmatprep.subr.mxu0 0.0
    %1298 = vmatpush1.msra.mxu0 0.0
    %1299 = vmatprep.subr.mxu0 0.0
    %1300 = vmatpush1.msra.mxu0 0.0
    %1301 = vmatprep.subr.mxu0 0.0
    %1302 = vmatpush1.msra.mxu0 0.0
    %1303 = vmatprep.subr.mxu0 0.0
    %1304 = vmatpush1.msra.mxu0 0.0
    %1305 = vmatprep.subr.mxu0 0.0
    %1306 = vmatpush1.msra.mxu0 0.0
    %1307 = vmatprep.subr.mxu0 0.0
    %1308 = vmatpush1.msra.mxu0 0.0
    %1309 = vmatprep.subr.mxu0 0.0
    %1310 = vmatpush1.msra.mxu0 0.0
    %1311 = vmatprep.subr.mxu0 0.0
    %1312 = vmatpush1.msra.mxu0 0.0
    %1313 = vmatprep.subr.mxu0 0.0
    %1314 = vmatpush1.msra.mxu0 0.0
    %1315 = vmatprep.subr.mxu0 0.0
    %1316 = vmatpush1.msra.mxu0 0.0
    %1317 = vmatprep.subr.mxu0 0.0
    %1318 = vmatpush1.msra.mxu0 0.0
    %1319 = vmatprep.subr.mxu0 0.0
    %1320 = vmatpush1.msra.mxu0 0.0
    %1321 = vmatprep.subr.mxu0 0.0
    %1322 = vmatpush1.msra.mxu0 0.0
    %1323 = vmatprep.subr.mxu0 0.0
    %1324 = vmatpush1.msra.mxu0 0.0
    %1325 = vmatprep.subr.mxu0 0.0
    %1326 = vmatpush1.msra.mxu0 0.0
    %1327 = vmatprep.subr.mxu0 0.0
    %1328 = vmatpush1.msra.mxu0 0.0
    %1329 = vmatprep.subr.mxu0 0.0
    %1330 = vmatpush1.msra.mxu0 0.0
    %1331 = vmatprep.subr.mxu0 0.0
    %1332 = vmatpush1.msra.mxu0 0.0
    %1333 = vmatprep.subr.mxu0 0.0
    %1334 = vmatpush1.msra.mxu0 0.0
    %1335 = vmatprep.subr.mxu0 0.0
    %1336 = vmatpush1.msra.mxu0 0.0
    %1337 = vmatprep.subr.mxu0 0.0
    %1338 = vmatpush1.msra.mxu0 0.0
    %1339 = vmatprep.subr.mxu0 0.0
    %1340 = vmatpush1.msra.mxu0 0.0
    %1341 = vmatprep.subr.mxu0 0.0
    %1342 = vmatpush1.msra.mxu0 0.0
    %1343 = vmatprep.subr.mxu0 0.0
    %1344 = vmatpush1.msra.mxu0 0.0
    %1345 = vmatprep.mubr.f32.mxu0 0.0
    %1346 = vmatmul.mubr.f32.gmra.mrb[0].mxu0 %v1270
    %v1347 = vpop.f32.mrb[0].mxu0
    %v1348 = vadd.f32 %v1267, %v1347
    %v1349 = vpop.f32.mrb[0].mxu0
    %1350 = vmatprep.mubr.f32.mxu0 0.0
    %1351 = vmatmul.mubr.f32.gmra.mrb[0].mxu0 %v1273
    %v1352 = vpop.f32.mrb[0].mxu0
    %v1353 = vadd.f32 %v1267, %v1352
    %v1354 = vpop.f32.mrb[0].mxu0
    %1355 = vmatprep.mubr.f32.mxu0 0.0
    %1356 = vmatmul.mubr.f32.gmra.mrb[0].mxu0 %v1276
    %v1357 = vpop.f32.mrb[0].mxu0
    %v1358 = vadd.f32 %v1267, %v1357
    %v1359 = vpop.f32.mrb[0].mxu0
    %1360 = vmatprep.mubr.f32.mxu0 0.0
    %1361 = vmatmul.mubr.f32.gmra.mrb[0].mxu0 %v1279
    %v1362 = vpop.f32.mrb[0].mxu0
    %v1363 = vadd.f32 %v1267, %v1362
    %v1364 = vpop.f32.mrb[0].mxu0
    %1365 = vdwg.mxu0
    %1366 = vst.msk [vmem:[#allocation10] sm:$0xff] %vm137, %v1348
    %1367 = vst.msk [vmem:[#allocation10 + $0x8] sm:$0xff] %vm137, %v1353
    %1368 = vst.msk [vmem:[#allocation10 + $0x10] sm:$0xff] %vm137, %v1358
    %1369 = vst.msk [vmem:[#allocation10 + $0x18] sm:$0xff] %vm137, %v1363
    %1370 = vst.msk [vmem:[#allocation11] sm:$0xff] %vm137, %v842
    %1371 = vst.msk [vmem:[#allocation11 + $0x8] sm:$0xff] %vm137, %v843
    %1372 = vst.msk [vmem:[#allocation11 + $0x10] sm:$0xff] %vm137, %v1246
    %1373 = vst.msk [vmem:[#allocation11 + $0x18] sm:$0xff] %vm137, %v1247
    // Predicated region
    $region50: #{tpu_custom_call.1} parent=1 // pred_check
      _
    $region51: #{tpu_custom_call.1} parent=1 // pred_check_branch
      %1375 = sbr.rel (0) target = $region53
    $region52: #{tpu_custom_call.1} parent=1 // pred_region
      %s1377 = ssub.s32 512, 512
      %1378 = vsyncadd [#allocation4], %s1377
      %s1379 = sshll.u32 [#allocation10], 4
      %s1380 = int_to_ptr.vmem [resolvable:$true] %s1379
      %1385 = dma.vmem_to_hbm [thread:$0]  %s1380, 512, %s8, [#allocation4], 128, 128, 8
    $region53: #{tpu_custom_call.1} parent=1 // pred_fallthru
      _
    // Predicated region
    $region54: #{tpu_custom_call.1} parent=1 // pred_check
      _
    $region55: #{tpu_custom_call.1} parent=1 // pred_check_branch
      %1387 = sbr.rel (0) target = $region57
    $region56: #{tpu_custom_call.1} parent=1 // pred_region
      %s1389 = ssub.s32 512, 512
      %1390 = vsyncadd [#allocation12], %s1389
      %s1391 = sshll.u32 [#allocation11], 4
      %s1392 = int_to_ptr.vmem [resolvable:$true] %s1391
      %1397 = dma.vmem_to_hbm [thread:$0]  %s1392, 512, %s9, [#allocation12], 128, 128, 8
    $region57: #{tpu_custom_call.1} parent=1 // pred_fallthru
      _
    // Predicated region
    $region58: #{tpu_custom_call.1} parent=1 // pred_check
      _
    $region59: #{tpu_custom_call.1} parent=1 // pred_check_branch
      %1399 = sbr.rel (0) target = $region61
    $region60: #{tpu_custom_call.1} parent=1 // pred_region
      %1400 = dma.done [#allocation4], 512
    $region61: #{tpu_custom_call.1} parent=1 // pred_fallthru
      _
    // Predicated region
    $region62: #{tpu_custom_call.1} parent=1 // pred_check
      _
    $region63: #{tpu_custom_call.1} parent=1 // pred_check_branch
      %1402 = sbr.rel (0) target = $region65
    $region64: #{tpu_custom_call.1} parent=1 // pred_region
      %1403 = dma.done [#allocation12], 512
    $region65: #{tpu_custom_call.1} parent=1 // pred_fallthru
      _
    %1404 = vsyncpa [#allocation3], 1
    %1405 = vsyncpa [#allocation6], 1
    %1406 = vsyncpa [#allocation9], 1
    %1407 = vsyncpa [#allocation4], 1
    %1408 = vsyncpa [#allocation12], 1

</llo_original>
